<compile_context>
chip_gen: v7x
topology: tpu7x:2x2x1
jax: 0.10.0
libtpu: 0.0.40
codegen_flags: <defaults>
</compile_context>

<pallas_src>
import functools
import math

import jax
import jax.numpy as jnp
from jax.experimental import pallas as pl
from jax.experimental.pallas import tpu as pltpu

LN_EPS = 1e-5      # torch.nn.LayerNorm default eps
_LANES = 128       # lane-dense parameter slab width

_PARAM_ORDER = (
    # 2-D weights
    "w_lin", "w0a", "w0b", "w_k", "wt1", "wt2", "w1a", "w1b", "w_head",
    # bias / layernorm rows
    "b_lin", "b0a", "b0b", "g_mix", "beta_mix", "b_k", "w_le", "b_le",
    "bt1", "g1", "beta1", "b1a", "b1b", "g_head", "beta_head", "b_head",
)


# -----------------------------------------------------------------------------
# Parameter packing: one lane-dense (rows, 128) slab, built once outside the
# hot path.  Every parameter starts at an 8-row (sublane-group) boundary.
# -----------------------------------------------------------------------------
def pack_params(params):
    rows, offsets, r = [], {}, 0
    for name in _PARAM_ORDER:
        a = jnp.asarray(params[name], jnp.float32)
        if a.ndim == 1:
            a = a.reshape(1, -1)
        nr, nc = a.shape
        assert nc <= _LANES
        offsets[name] = (r, nr, nc)
        block = jnp.pad(a, ((0, (-nr) % 8), (0, _LANES - nc)))
        rows.append(block)
        r += block.shape[0]
    slab = jnp.concatenate(rows, axis=0)          # (rows, 128), rows % 8 == 0
    return slab, offsets


# -----------------------------------------------------------------------------
# Single fused kernel: encode -> distances -> top-k -> mixer -> predictor -> head
# -----------------------------------------------------------------------------
def _tabr_fused_kernel(n_query, context_size, offs,
                       xq_ref, xc_ref, cy_ref, p_ref,
                       out_ref, allx_s):
    f32 = jnp.float32
    B = n_query
    n_cand = xc_ref.shape[0]

    def P(name):                                  # static slice of the param slab
        r, nr, nc = offs[name]
        return p_ref[r:r + nr, 0:nc]

    def layernorm(h, g, b):
        mu = jnp.mean(h, axis=-1, keepdims=True)
        var = jnp.mean((h - mu) ** 2, axis=-1, keepdims=True)
        return (h - mu) * jax.lax.rsqrt(var + LN_EPS) * g + b

    # ---- stack query + candidate rows in a VMEM scratch (no XLA concat op) -------
    allx_s[0:B, :] = xq_ref[...]
    allx_s[B:B + n_cand, :] = xc_ref[...]
    allx = allx_s[...]                            # [B+N, d_in], query rows first
    N = n_cand

    # ---------------- _encode() on query + candidate rows together ----------------
    h = jnp.dot(allx, P("w_lin"), preferred_element_type=f32) + P("b_lin")
    # encoder block 0 (prenorm=False): Linear -> ReLU -> Linear, residual
    z = jnp.maximum(jnp.dot(h, P("w0a"), preferred_element_type=f32) + P("b0a"), 0.0)
    h = h + jnp.dot(z, P("w0b"), preferred_element_type=f32) + P("b0b")
    # mixer normalization + K
    hn = layernorm(h, P("g_mix"), P("beta_mix"))
    kk = jnp.dot(hn, P("w_k"), preferred_element_type=f32) + P("b_k")    # [B+N, D]

    x_enc = h[:B]                                 # [B, D]
    k = kk[:B]                                    # [B, D]   query keys
    ck = kk[B:]                                   # [N, D]   candidate keys

    # -------- similarities (faiss L2 metric); per-row -||k||^2 constant dropped ----
    cross = jax.lax.dot_general(k, ck, (((1,), (1,)), ((), ())),
                                preferred_element_type=f32)              # [B, N]
    ck_sq = jnp.sum(ck * ck, axis=-1)                                    # [N]
    sim = 2.0 * cross - ck_sq[None, :]                                   # [B, N]

    # ---------------- one-shot top-`context_size` via ranks ------------------------
    # rank[b,n] = #{m: sim[b,m] > sim[b,n]} + #{m: sim[b,m]==sim[b,n], m<n}
    # selected  = rank < context_size   (identical to lax.top_k lowest-index ties)
    # TODO(synk): faiss exact-search tie ordering may differ on exact distance ties.
    sm = sim[:, :, None]                          # sim[b, m]   -> [B, N, 1]
    sn = sim[:, None, :]                          # sim[b, n]   -> [B, 1, N]
    iota_m = jax.lax.broadcasted_iota(jnp.int32, (B, N, N), 1)
    iota_n = jax.lax.broadcasted_iota(jnp.int32, (B, N, N), 2)
    beats = jnp.logical_or(sm > sn, jnp.logical_and(sm == sn, iota_m < iota_n))
    rank = jnp.sum(jnp.where(beats, 1.0, 0.0), axis=1)                   # [B, N]
    selected = rank < context_size                                       # [B, N]

    # softmax over the selected context only (non-selected -> probability exactly 0)
    neg_inf = f32(-jnp.inf)
    masked = jnp.where(selected, sim, neg_inf)
    e = jnp.exp(masked - jnp.max(masked, axis=-1, keepdims=True))
    probs = e / jnp.sum(e, axis=-1, keepdims=True)                       # [B, N]

    # ---------------- retrieval mixer ----------------------------------------------
    # Label encoder folded through the probability sum (probs sums to exactly 1):
    #   sum_n p_n (y_n * w_le + b_le) = (sum_n p_n y_n) * w_le + b_le
    cy = cy_ref[...]                                                     # [1, N]
    wy = jnp.sum(probs * cy, axis=-1, keepdims=True)                     # [B, 1]
    ctx_y = wy * P("w_le") + P("b_le")                                   # [B, D]

    # T(k - ck): first Linear distributed over the subtraction (exact algebra),
    # one [B+N, D] @ [D, d_block] MXU matmul on the already-resident kk.
    kkw = jnp.dot(kk, P("wt1"), preferred_element_type=f32)              # [B+N, E]
    kw = kkw[:B] + P("bt1")                                              # [B, E]
    ckw = kkw[B:]                                                        # [N, E]
    # TODO(synk): if n_cand grows, gather only the selected context rows here (and
    # tile candidates on a grid axis) instead of materializing [B, N, d_block].
    th = jnp.maximum(kw[:, None, :] - ckw[None, :, :], 0.0)              # [B, N, E]
    s = jnp.sum(probs[:, :, None] * th, axis=1)                          # [B, E]
    ctx_t = jnp.dot(s, P("wt2"), preferred_element_type=f32)             # [B, D]

    x = x_enc + ctx_y + ctx_t

    # ---------------- predictor block (prenorm) + head ------------------------------
    hn = layernorm(x, P("g1"), P("beta1"))
    z = jnp.maximum(jnp.dot(hn, P("w1a"), preferred_element_type=f32) + P("b1a"), 0.0)
    x = x + jnp.dot(z, P("w1b"), preferred_element_type=f32) + P("b1b")

    hn = jnp.maximum(layernorm(x, P("g_head"), P("beta_head")), 0.0)
    out_ref[...] = jnp.dot(hn, P("w_head"), preferred_element_type=f32) + P("b_head")


# -----------------------------------------------------------------------------
# Wrapper: one pallas_call, everything VMEM-resident (shapes are tiny)
# -----------------------------------------------------------------------------
_VMEM = pl.BlockSpec(memory_space=pltpu.MemorySpace.VMEM)


def tabr_forward(x_num, candidate_x_num, candidate_y, param_slab, *,
                 param_offsets, context_size):
    b, d_in = x_num.shape
    n_cand = candidate_x_num.shape[0]
    assert context_size <= n_cand
    d_out = param_offsets["w_head"][2]

    # (N,) -> (1, N): row-major layouts are identical, so this is metadata-only
    # (no HBM round trip), unlike the former (B+N, d_in) concatenation.
    cy_row = candidate_y.reshape(1, n_cand)

    kernel = functools.partial(_tabr_fused_kernel, b, context_size, param_offsets)
    # All operands are tiny (<300 KiB total): one ungridded call, 4 input DMAs.
    # TODO(synk): at realistic B / n_cand, add grid axes (query tiles "parallel" so
    # v7x's 2 TensorCores are both used, candidate tiles "arbitrary") and size the
    # blocks against the per-generation VMEM limit via pltpu.CompilerParams(
    # vmem_limit_bytes=...); today the shapes make the kernel launch/DMA bound.
    return pl.pallas_call(
        kernel,
        out_shape=jax.ShapeDtypeStruct((b, d_out), jnp.float32),
        in_specs=[_VMEM] * 4,
        out_specs=_VMEM,
        scratch_shapes=[pltpu.VMEM((b + n_cand, d_in), jnp.float32)],
    )(x_num, candidate_x_num, cy_row, param_slab)


# -----------------------------------------------------------------------------
# Deterministic parameter init (PyTorch-style shapes, Kaiming-uniform-ish scale)
# -----------------------------------------------------------------------------
def init_params(key, *, d_in, d_main, d_block, d_out):
    keys = iter(jax.random.split(key, 32))

    def lin(fan_in, shape):
        bound = 1.0 / math.sqrt(fan_in)
        return jax.random.uniform(next(keys), shape, jnp.float32, -bound, bound)

    le_bound = 1.0 / math.sqrt(2.0)   # reset_parameters() for label_encoder Linear(1, d_main)
    return {
        # self.linear
        "w_lin": lin(d_in, (d_in, d_main)), "b_lin": lin(d_in, (1, d_main)),
        # blocks0[0]
        "w0a": lin(d_main, (d_main, d_block)), "b0a": lin(d_main, (1, d_block)),
        "w0b": lin(d_block, (d_block, d_main)), "b0b": lin(d_block, (1, d_main)),
        # mixer normalization (LayerNorm)
        "g_mix": jnp.ones((1, d_main), jnp.float32),
        "beta_mix": jnp.zeros((1, d_main), jnp.float32),
        # K
        "w_k": lin(d_main, (d_main, d_main)), "b_k": lin(d_main, (1, d_main)),
        # label_encoder = Linear(1, d_main), uniform(-1/sqrt(2), 1/sqrt(2))
        "w_le": jax.random.uniform(next(keys), (1, d_main), jnp.float32, -le_bound, le_bound),
        "b_le": jax.random.uniform(next(keys), (1, d_main), jnp.float32, -le_bound, le_bound),
        # T
        "wt1": lin(d_main, (d_main, d_block)), "bt1": lin(d_main, (1, d_block)),
        "wt2": lin(d_block, (d_block, d_main)),     # bias=False
        # blocks1[0] (prenorm)
        "g1": jnp.ones((1, d_main), jnp.float32),
        "beta1": jnp.zeros((1, d_main), jnp.float32),
        "w1a": lin(d_main, (d_main, d_block)), "b1a": lin(d_main, (1, d_block)),
        "w1b": lin(d_block, (d_block, d_main)), "b1b": lin(d_block, (1, d_main)),
        # head
        "g_head": jnp.ones((1, d_main), jnp.float32),
        "beta_head": jnp.zeros((1, d_main), jnp.float32),
        "w_head": lin(d_main, (d_main, d_out)), "b_head": lin(d_main, (1, d_out)),
    }


if __name__ == "__main__":
    # small shapes consistent with the module
    B, N_CAND, N_NUM = 8, 32, 16
    D_MAIN, D_MULT = 32, 2.0
    D_BLOCK = int(D_MAIN * D_MULT)
    D_OUT = 1                              # n_classes=None -> regression -> d_out=1
    CONTEXT_SIZE = 8

    root = jax.random.PRNGKey(0)
    k_param, k_x, k_cx, k_cy = jax.random.split(root, 4)

    params = init_params(k_param, d_in=N_NUM, d_main=D_MAIN, d_block=D_BLOCK, d_out=D_OUT)
    # Pack the 27 tiny parameters into one lane-dense slab ONCE, outside the hot path.
    param_slab, param_offsets = pack_params(params)
    param_slab = jax.device_put(param_slab)

    x_num = jax.random.normal(k_x, (B, N_NUM), jnp.float32)
    candidate_x_num = jax.random.normal(k_cx, (N_CAND, N_NUM), jnp.float32)
    candidate_y = jax.random.normal(k_cy, (N_CAND,), jnp.float32)

    fwd = jax.jit(functools.partial(tabr_forward,
                                    param_offsets=param_offsets,
                                    context_size=CONTEXT_SIZE))
    out = fwd(x_num, candidate_x_num, candidate_y, param_slab)
    jax.block_until_ready(out)

    assert out.shape == (B, D_OUT) and out.dtype == jnp.float32
    assert bool(jnp.all(jnp.isfinite(out)))
    print("KERNEL_OK")
</pallas_src>

<mosaic_0001>
module attributes {stable_mosaic.version = 11 : i64} {
  func.func @_tabr_fused_kernel(%arg0: memref<8x16xf32, #tpu.memory_space<vmem>>, %arg1: memref<32x16xf32, #tpu.memory_space<vmem>>, %arg2: memref<1x32xf32, #tpu.memory_space<vmem>>, %arg3: memref<496x128xf32, #tpu.memory_space<vmem>>, %arg4: memref<8x1xf32, #tpu.memory_space<vmem>>, %arg5: memref<40x16xf32, #tpu.memory_space<vmem>>) attributes {dimension_semantics = [], scalar_prefetch = 0 : i64, scratch_operands = 1 : i64, tpu.core_type = #tpu.core_type<tc>} {
    %c0 = arith.constant 0 : index
    %c0_0 = arith.constant 0 : index
    %0 = vector.load %arg0[%c0, %c0_0] : memref<8x16xf32, #tpu.memory_space<vmem>>, vector<8x16xf32>
    %c0_1 = arith.constant 0 : index
    %c0_2 = arith.constant 0 : index
    %1 = vector.load %arg5[%c0_1, %c0_2] : memref<40x16xf32, #tpu.memory_space<vmem>>, vector<8x16xf32>
    tpu.vector_store %arg5[%c0_1, %c0_2], %0 {strides = array<i32>} : memref<40x16xf32, #tpu.memory_space<vmem>>, vector<8x16xf32>,
    %c0_3 = arith.constant 0 : index
    %c0_4 = arith.constant 0 : index
    %2 = vector.load %arg1[%c0_3, %c0_4] : memref<32x16xf32, #tpu.memory_space<vmem>>, vector<32x16xf32>
    %c8 = arith.constant 8 : index
    %c0_5 = arith.constant 0 : index
    %3 = vector.load %arg5[%c8, %c0_5] : memref<40x16xf32, #tpu.memory_space<vmem>>, vector<32x16xf32>
    tpu.vector_store %arg5[%c8, %c0_5], %2 {strides = array<i32>} : memref<40x16xf32, #tpu.memory_space<vmem>>, vector<32x16xf32>,
    %c0_6 = arith.constant 0 : index
    %c0_7 = arith.constant 0 : index
    %4 = vector.load %arg5[%c0_6, %c0_7] : memref<40x16xf32, #tpu.memory_space<vmem>>, vector<40x16xf32>
    %c0_8 = arith.constant 0 : index
    %c0_9 = arith.constant 0 : index
    %5 = vector.load %arg3[%c0_8, %c0_9] : memref<496x128xf32, #tpu.memory_space<vmem>>, vector<16x32xf32>
    %cst = arith.constant dense<0.000000e+00> : vector<40x32xf32>
    %6 = tpu.matmul %4, %5, %cst {dimension_numbers = #tpu.dot_dimension_numbers<[1], [0], [0], [1], [0, 0, 1, 1], [], []>} : vector<40x16xf32>, vector<16x32xf32>, vector<40x32xf32> -> vector<40x32xf32>
    %c368 = arith.constant 368 : index
    %c0_10 = arith.constant 0 : index
    %7 = vector.load %arg3[%c368, %c0_10] : memref<496x128xf32, #tpu.memory_space<vmem>>, vector<1x32xf32>
    %8 = vector.broadcast %7 : vector<1x32xf32> to vector<40x32xf32>
    %9 = arith.addf %6, %8 : vector<40x32xf32>
    %c16 = arith.constant 16 : index
    %c0_11 = arith.constant 0 : index
    %10 = vector.load %arg3[%c16, %c0_11] : memref<496x128xf32, #tpu.memory_space<vmem>>, vector<32x64xf32>
    %cst_12 = arith.constant dense<0.000000e+00> : vector<40x64xf32>
    %11 = tpu.matmul %9, %10, %cst_12 {dimension_numbers = #tpu.dot_dimension_numbers<[1], [0], [0], [1], [0, 0, 1, 1], [], []>} : vector<40x32xf32>, vector<32x64xf32>, vector<40x64xf32> -> vector<40x64xf32>
    %c376 = arith.constant 376 : index
    %c0_13 = arith.constant 0 : index
    %12 = vector.load %arg3[%c376, %c0_13] : memref<496x128xf32, #tpu.memory_space<vmem>>, vector<1x64xf32>
    %13 = vector.broadcast %12 : vector<1x64xf32> to vector<40x64xf32>
    %14 = arith.addf %11, %13 : vector<40x64xf32>
    %cst_14 = arith.constant 0.000000e+00 : f32
    %15 = vector.broadcast %cst_14 : f32 to vector<40x64xf32>
    %16 = arith.maximumf %14, %15 : vector<40x64xf32>
    %c48 = arith.constant 48 : index
    %c0_15 = arith.constant 0 : index
    %17 = vector.load %arg3[%c48, %c0_15] : memref<496x128xf32, #tpu.memory_space<vmem>>, vector<64x32xf32>
    %cst_16 = arith.constant dense<0.000000e+00> : vector<40x32xf32>
    %18 = tpu.matmul %16, %17, %cst_16 {dimension_numbers = #tpu.dot_dimension_numbers<[1], [0], [0], [1], [0, 0, 1, 1], [], []>} : vector<40x64xf32>, vector<64x32xf32>, vector<40x32xf32> -> vector<40x32xf32>
    %19 = arith.addf %9, %18 : vector<40x32xf32>
    %c384 = arith.constant 384 : index
    %c0_17 = arith.constant 0 : index
    %20 = vector.load %arg3[%c384, %c0_17] : memref<496x128xf32, #tpu.memory_space<vmem>>, vector<1x32xf32>
    %21 = vector.broadcast %20 : vector<1x32xf32> to vector<40x32xf32>
    %22 = arith.addf %19, %21 : vector<40x32xf32>
    %c392 = arith.constant 392 : index
    %c0_18 = arith.constant 0 : index
    %23 = vector.load %arg3[%c392, %c0_18] : memref<496x128xf32, #tpu.memory_space<vmem>>, vector<1x32xf32>
    %c400 = arith.constant 400 : index
    %c0_19 = arith.constant 0 : index
    %24 = vector.load %arg3[%c400, %c0_19] : memref<496x128xf32, #tpu.memory_space<vmem>>, vector<1x32xf32>
    %cst_20 = arith.constant dense<0.000000e+00> : vector<40xf32>
    %25 = vector.multi_reduction <add>, %22, %cst_20 [1] : vector<40x32xf32> to vector<40xf32>
    %26 = vector.shape_cast %25 : vector<40xf32> to vector<40x1xf32>
    %cst_21 = arith.constant 3.200000e+01 : f32
    %27 = vector.broadcast %cst_21 : f32 to vector<40x1xf32>
    %28 = arith.divf %26, %27 : vector<40x1xf32>
    %29 = vector.broadcast %28 : vector<40x1xf32> to vector<40x32xf32>
    %30 = arith.subf %22, %29 : vector<40x32xf32>
    %31 = arith.mulf %30, %30 : vector<40x32xf32>
    %cst_22 = arith.constant dense<0.000000e+00> : vector<40xf32>
    %32 = vector.multi_reduction <add>, %31, %cst_22 [1] : vector<40x32xf32> to vector<40xf32>
    %33 = vector.shape_cast %32 : vector<40xf32> to vector<40x1xf32>
    %cst_23 = arith.constant 3.200000e+01 : f32
    %34 = vector.broadcast %cst_23 : f32 to vector<40x1xf32>
    %35 = arith.divf %33, %34 : vector<40x1xf32>
    %36 = vector.broadcast %28 : vector<40x1xf32> to vector<40x32xf32>
    %37 = arith.subf %22, %36 : vector<40x32xf32>
    %cst_24 = arith.constant 9.99999974E-6 : f32
    %38 = vector.broadcast %cst_24 : f32 to vector<40x1xf32>
    %39 = arith.addf %35, %38 : vector<40x1xf32>
    %40 = math.rsqrt %39 : vector<40x1xf32>
    %41 = vector.broadcast %40 : vector<40x1xf32> to vector<40x32xf32>
    %42 = arith.mulf %37, %41 : vector<40x32xf32>
    %43 = vector.broadcast %23 : vector<1x32xf32> to vector<40x32xf32>
    %44 = arith.mulf %42, %43 : vector<40x32xf32>
    %45 = vector.broadcast %24 : vector<1x32xf32> to vector<40x32xf32>
    %46 = arith.addf %44, %45 : vector<40x32xf32>
    %c112 = arith.constant 112 : index
    %c0_25 = arith.constant 0 : index
    %47 = vector.load %arg3[%c112, %c0_25] : memref<496x128xf32, #tpu.memory_space<vmem>>, vector<32x32xf32>
    %cst_26 = arith.constant dense<0.000000e+00> : vector<40x32xf32>
    %48 = tpu.matmul %46, %47, %cst_26 {dimension_numbers = #tpu.dot_dimension_numbers<[1], [0], [0], [1], [0, 0, 1, 1], [], []>} : vector<40x32xf32>, vector<32x32xf32>, vector<40x32xf32> -> vector<40x32xf32>
    %c408 = arith.constant 408 : index
    %c0_27 = arith.constant 0 : index
    %49 = vector.load %arg3[%c408, %c0_27] : memref<496x128xf32, #tpu.memory_space<vmem>>, vector<1x32xf32>
    %50 = vector.broadcast %49 : vector<1x32xf32> to vector<40x32xf32>
    %51 = arith.addf %48, %50 : vector<40x32xf32>
    %52 = vector.extract_strided_slice %22 {offsets = [0, 0], sizes = [8, 32], strides = [1, 1]} : vector<40x32xf32> to vector<8x32xf32>
    %53 = vector.extract_strided_slice %51 {offsets = [0, 0], sizes = [8, 32], strides = [1, 1]} : vector<40x32xf32> to vector<8x32xf32>
    %54 = vector.extract_strided_slice %51 {offsets = [8, 0], sizes = [32, 32], strides = [1, 1]} : vector<40x32xf32> to vector<32x32xf32>
    %cst_28 = arith.constant dense<0.000000e+00> : vector<8x32xf32>
    %55 = tpu.matmul %53, %54, %cst_28 {dimension_numbers = #tpu.dot_dimension_numbers<[1], [1], [0], [0], [0, 0, 1, 0], [], []>} : vector<8x32xf32>, vector<32x32xf32>, vector<8x32xf32> -> vector<8x32xf32>
    %56 = arith.mulf %54, %54 : vector<32x32xf32>
    %cst_29 = arith.constant dense<0.000000e+00> : vector<32xf32>
    %57 = vector.multi_reduction <add>, %56, %cst_29 [1] : vector<32x32xf32> to vector<32xf32>
    %cst_30 = arith.constant 2.000000e+00 : f32
    %58 = vector.broadcast %cst_30 : f32 to vector<8x32xf32>
    %59 = arith.mulf %58, %55 : vector<8x32xf32>
    %60 = vector.shape_cast %57 : vector<32xf32> to vector<1x32xf32>
    %61 = vector.broadcast %60 : vector<1x32xf32> to vector<8x32xf32>
    %62 = arith.subf %59, %61 : vector<8x32xf32>
    %63 = vector.shape_cast %62 : vector<8x32xf32> to vector<8x32x1xf32>
    %64 = vector.shape_cast %62 : vector<8x32xf32> to vector<8x1x32xf32>
    %65 = tpu.iota {dimensions = array<i32: 1>} : vector<8x32x32xi32>
    %66 = tpu.iota {dimensions = array<i32: 2>} : vector<8x32x32xi32>
    %67 = vector.broadcast %63 : vector<8x32x1xf32> to vector<8x32x32xf32>
    %68 = vector.broadcast %64 : vector<8x1x32xf32> to vector<8x32x32xf32>
    %69 = arith.cmpf ogt, %67, %68 : vector<8x32x32xf32>
    %70 = vector.broadcast %63 : vector<8x32x1xf32> to vector<8x32x32xf32>
    %71 = vector.broadcast %64 : vector<8x1x32xf32> to vector<8x32x32xf32>
    %72 = arith.cmpf oeq, %70, %71 : vector<8x32x32xf32>
    %73 = arith.cmpi slt, %65, %66 : vector<8x32x32xi32>
    %74 = arith.andi %72, %73 : vector<8x32x32xi1>
    %75 = arith.ori %69, %74 : vector<8x32x32xi1>
    %cst_31 = arith.constant 1.000000e+00 : f32
    %cst_32 = arith.constant 0.000000e+00 : f32
    %76 = vector.broadcast %cst_31 : f32 to vector<8x32x32xf32>
    %77 = vector.broadcast %cst_32 : f32 to vector<8x32x32xf32>
    %78 = arith.select %75, %76, %77 : vector<8x32x32xi1>, vector<8x32x32xf32>
    %cst_33 = arith.constant dense<0.000000e+00> : vector<8x32xf32>
    %79 = vector.multi_reduction <add>, %78, %cst_33 [1] : vector<8x32x32xf32> to vector<8x32xf32>
    %cst_34 = arith.constant 8.000000e+00 : f32
    %80 = vector.broadcast %cst_34 : f32 to vector<8x32xf32>
    %81 = arith.cmpf olt, %79, %80 : vector<8x32xf32>
    %cst_35 = arith.constant 0xFF800000 : f32
    %82 = vector.broadcast %cst_35 : f32 to vector<8x32xf32>
    %83 = arith.select %81, %62, %82 : vector<8x32xi1>, vector<8x32xf32>
    %cst_36 = arith.constant dense<0xFF800000> : vector<8xf32>
    %84 = vector.multi_reduction <maximumf>, %83, %cst_36 [1] : vector<8x32xf32> to vector<8xf32>
    %85 = vector.shape_cast %84 : vector<8xf32> to vector<8x1xf32>
    %86 = vector.broadcast %85 : vector<8x1xf32> to vector<8x32xf32>
    %87 = arith.subf %83, %86 : vector<8x32xf32>
    %88 = math.exp %87 : vector<8x32xf32>
    %cst_37 = arith.constant dense<0.000000e+00> : vector<8xf32>
    %89 = vector.multi_reduction <add>, %88, %cst_37 [1] : vector<8x32xf32> to vector<8xf32>
    %90 = vector.shape_cast %89 : vector<8xf32> to vector<8x1xf32>
    %91 = vector.broadcast %90 : vector<8x1xf32> to vector<8x32xf32>
    %92 = arith.divf %88, %91 : vector<8x32xf32>
    %c0_38 = arith.constant 0 : index
    %c0_39 = arith.constant 0 : index
    %93 = vector.load %arg2[%c0_38, %c0_39] : memref<1x32xf32, #tpu.memory_space<vmem>>, vector<1x32xf32>
    %94 = vector.broadcast %93 : vector<1x32xf32> to vector<8x32xf32>
    %95 = arith.mulf %92, %94 : vector<8x32xf32>
    %cst_40 = arith.constant dense<0.000000e+00> : vector<8xf32>
    %96 = vector.multi_reduction <add>, %95, %cst_40 [1] : vector<8x32xf32> to vector<8xf32>
    %97 = vector.shape_cast %96 : vector<8xf32> to vector<8x1xf32>
    %c416 = arith.constant 416 : index
    %c0_41 = arith.constant 0 : index
    %98 = vector.load %arg3[%c416, %c0_41] : memref<496x128xf32, #tpu.memory_space<vmem>>, vector<1x32xf32>
    %99 = vector.broadcast %97 : vector<8x1xf32> to vector<8x32xf32>
    %100 = vector.broadcast %98 : vector<1x32xf32> to vector<8x32xf32>
    %101 = arith.mulf %99, %100 : vector<8x32xf32>
    %c424 = arith.constant 424 : index
    %c0_42 = arith.constant 0 : index
    %102 = vector.load %arg3[%c424, %c0_42] : memref<496x128xf32, #tpu.memory_space<vmem>>, vector<1x32xf32>
    %103 = vector.broadcast %102 : vector<1x32xf32> to vector<8x32xf32>
    %104 = arith.addf %101, %103 : vector<8x32xf32>
    %c144 = arith.constant 144 : index
    %c0_43 = arith.constant 0 : index
    %105 = vector.load %arg3[%c144, %c0_43] : memref<496x128xf32, #tpu.memory_space<vmem>>, vector<32x64xf32>
    %cst_44 = arith.constant dense<0.000000e+00> : vector<40x64xf32>
    %106 = tpu.matmul %51, %105, %cst_44 {dimension_numbers = #tpu.dot_dimension_numbers<[1], [0], [0], [1], [0, 0, 1, 1], [], []>} : vector<40x32xf32>, vector<32x64xf32>, vector<40x64xf32> -> vector<40x64xf32>
    %107 = vector.extract_strided_slice %106 {offsets = [0, 0], sizes = [8, 64], strides = [1, 1]} : vector<40x64xf32> to vector<8x64xf32>
    %c432 = arith.constant 432 : index
    %c0_45 = arith.constant 0 : index
    %108 = vector.load %arg3[%c432, %c0_45] : memref<496x128xf32, #tpu.memory_space<vmem>>, vector<1x64xf32>
    %109 = vector.broadcast %108 : vector<1x64xf32> to vector<8x64xf32>
    %110 = arith.addf %107, %109 : vector<8x64xf32>
    %111 = vector.extract_strided_slice %106 {offsets = [8, 0], sizes = [32, 64], strides = [1, 1]} : vector<40x64xf32> to vector<32x64xf32>
    %112 = vector.shape_cast %110 : vector<8x64xf32> to vector<8x1x64xf32>
    %113 = vector.shape_cast %111 : vector<32x64xf32> to vector<1x32x64xf32>
    %114 = vector.broadcast %112 : vector<8x1x64xf32> to vector<8x32x64xf32>
    %115 = vector.broadcast %113 : vector<1x32x64xf32> to vector<8x32x64xf32>
    %116 = arith.subf %114, %115 : vector<8x32x64xf32>
    %cst_46 = arith.constant 0.000000e+00 : f32
    %117 = vector.broadcast %cst_46 : f32 to vector<8x32x64xf32>
    %118 = arith.maximumf %116, %117 : vector<8x32x64xf32>
    %119 = vector.shape_cast %92 : vector<8x32xf32> to vector<8x32x1xf32>
    %120 = vector.broadcast %119 : vector<8x32x1xf32> to vector<8x32x64xf32>
    %121 = arith.mulf %120, %118 : vector<8x32x64xf32>
    %cst_47 = arith.constant dense<0.000000e+00> : vector<8x64xf32>
    %122 = vector.multi_reduction <add>, %121, %cst_47 [1] : vector<8x32x64xf32> to vector<8x64xf32>
    %c176 = arith.constant 176 : index
    %c0_48 = arith.constant 0 : index
    %123 = vector.load %arg3[%c176, %c0_48] : memref<496x128xf32, #tpu.memory_space<vmem>>, vector<64x32xf32>
    %cst_49 = arith.constant dense<0.000000e+00> : vector<8x32xf32>
    %124 = tpu.matmul %122, %123, %cst_49 {dimension_numbers = #tpu.dot_dimension_numbers<[1], [0], [0], [1], [0, 0, 1, 1], [], []>} : vector<8x64xf32>, vector<64x32xf32>, vector<8x32xf32> -> vector<8x32xf32>
    %125 = arith.addf %52, %104 : vector<8x32xf32>
    %126 = arith.addf %125, %124 : vector<8x32xf32>
    %c440 = arith.constant 440 : index
    %c0_50 = arith.constant 0 : index
    %127 = vector.load %arg3[%c440, %c0_50] : memref<496x128xf32, #tpu.memory_space<vmem>>, vector<1x32xf32>
    %c448 = arith.constant 448 : index
    %c0_51 = arith.constant 0 : index
    %128 = vector.load %arg3[%c448, %c0_51] : memref<496x128xf32, #tpu.memory_space<vmem>>, vector<1x32xf32>
    %cst_52 = arith.constant dense<0.000000e+00> : vector<8xf32>
    %129 = vector.multi_reduction <add>, %126, %cst_52 [1] : vector<8x32xf32> to vector<8xf32>
    %130 = vector.shape_cast %129 : vector<8xf32> to vector<8x1xf32>
    %cst_53 = arith.constant 3.200000e+01 : f32
    %131 = vector.broadcast %cst_53 : f32 to vector<8x1xf32>
    %132 = arith.divf %130, %131 : vector<8x1xf32>
    %133 = vector.broadcast %132 : vector<8x1xf32> to vector<8x32xf32>
    %134 = arith.subf %126, %133 : vector<8x32xf32>
    %135 = arith.mulf %134, %134 : vector<8x32xf32>
    %cst_54 = arith.constant dense<0.000000e+00> : vector<8xf32>
    %136 = vector.multi_reduction <add>, %135, %cst_54 [1] : vector<8x32xf32> to vector<8xf32>
    %137 = vector.shape_cast %136 : vector<8xf32> to vector<8x1xf32>
    %cst_55 = arith.constant 3.200000e+01 : f32
    %138 = vector.broadcast %cst_55 : f32 to vector<8x1xf32>
    %139 = arith.divf %137, %138 : vector<8x1xf32>
    %140 = vector.broadcast %132 : vector<8x1xf32> to vector<8x32xf32>
    %141 = arith.subf %126, %140 : vector<8x32xf32>
    %cst_56 = arith.constant 9.99999974E-6 : f32
    %142 = vector.broadcast %cst_56 : f32 to vector<8x1xf32>
    %143 = arith.addf %139, %142 : vector<8x1xf32>
    %144 = math.rsqrt %143 : vector<8x1xf32>
    %145 = vector.broadcast %144 : vector<8x1xf32> to vector<8x32xf32>
    %146 = arith.mulf %141, %145 : vector<8x32xf32>
    %147 = vector.broadcast %127 : vector<1x32xf32> to vector<8x32xf32>
    %148 = arith.mulf %146, %147 : vector<8x32xf32>
    %149 = vector.broadcast %128 : vector<1x32xf32> to vector<8x32xf32>
    %150 = arith.addf %148, %149 : vector<8x32xf32>
    %c240 = arith.constant 240 : index
    %c0_57 = arith.constant 0 : index
    %151 = vector.load %arg3[%c240, %c0_57] : memref<496x128xf32, #tpu.memory_space<vmem>>, vector<32x64xf32>
    %cst_58 = arith.constant dense<0.000000e+00> : vector<8x64xf32>
    %152 = tpu.matmul %150, %151, %cst_58 {dimension_numbers = #tpu.dot_dimension_numbers<[1], [0], [0], [1], [0, 0, 1, 1], [], []>} : vector<8x32xf32>, vector<32x64xf32>, vector<8x64xf32> -> vector<8x64xf32>
    %c456 = arith.constant 456 : index
    %c0_59 = arith.constant 0 : index
    %153 = vector.load %arg3[%c456, %c0_59] : memref<496x128xf32, #tpu.memory_space<vmem>>, vector<1x64xf32>
    %154 = vector.broadcast %153 : vector<1x64xf32> to vector<8x64xf32>
    %155 = arith.addf %152, %154 : vector<8x64xf32>
    %cst_60 = arith.constant 0.000000e+00 : f32
    %156 = vector.broadcast %cst_60 : f32 to vector<8x64xf32>
    %157 = arith.maximumf %155, %156 : vector<8x64xf32>
    %c272 = arith.constant 272 : index
    %c0_61 = arith.constant 0 : index
    %158 = vector.load %arg3[%c272, %c0_61] : memref<496x128xf32, #tpu.memory_space<vmem>>, vector<64x32xf32>
    %cst_62 = arith.constant dense<0.000000e+00> : vector<8x32xf32>
    %159 = tpu.matmul %157, %158, %cst_62 {dimension_numbers = #tpu.dot_dimension_numbers<[1], [0], [0], [1], [0, 0, 1, 1], [], []>} : vector<8x64xf32>, vector<64x32xf32>, vector<8x32xf32> -> vector<8x32xf32>
    %160 = arith.addf %126, %159 : vector<8x32xf32>
    %c464 = arith.constant 464 : index
    %c0_63 = arith.constant 0 : index
    %161 = vector.load %arg3[%c464, %c0_63] : memref<496x128xf32, #tpu.memory_space<vmem>>, vector<1x32xf32>
    %162 = vector.broadcast %161 : vector<1x32xf32> to vector<8x32xf32>
    %163 = arith.addf %160, %162 : vector<8x32xf32>
    %c472 = arith.constant 472 : index
    %c0_64 = arith.constant 0 : index
    %164 = vector.load %arg3[%c472, %c0_64] : memref<496x128xf32, #tpu.memory_space<vmem>>, vector<1x32xf32>
    %c480 = arith.constant 480 : index
    %c0_65 = arith.constant 0 : index
    %165 = vector.load %arg3[%c480, %c0_65] : memref<496x128xf32, #tpu.memory_space<vmem>>, vector<1x32xf32>
    %cst_66 = arith.constant dense<0.000000e+00> : vector<8xf32>
    %166 = vector.multi_reduction <add>, %163, %cst_66 [1] : vector<8x32xf32> to vector<8xf32>
    %167 = vector.shape_cast %166 : vector<8xf32> to vector<8x1xf32>
    %cst_67 = arith.constant 3.200000e+01 : f32
    %168 = vector.broadcast %cst_67 : f32 to vector<8x1xf32>
    %169 = arith.divf %167, %168 : vector<8x1xf32>
    %170 = vector.broadcast %169 : vector<8x1xf32> to vector<8x32xf32>
    %171 = arith.subf %163, %170 : vector<8x32xf32>
    %172 = arith.mulf %171, %171 : vector<8x32xf32>
    %cst_68 = arith.constant dense<0.000000e+00> : vector<8xf32>
    %173 = vector.multi_reduction <add>, %172, %cst_68 [1] : vector<8x32xf32> to vector<8xf32>
    %174 = vector.shape_cast %173 : vector<8xf32> to vector<8x1xf32>
    %cst_69 = arith.constant 3.200000e+01 : f32
    %175 = vector.broadcast %cst_69 : f32 to vector<8x1xf32>
    %176 = arith.divf %174, %175 : vector<8x1xf32>
    %177 = vector.broadcast %169 : vector<8x1xf32> to vector<8x32xf32>
    %178 = arith.subf %163, %177 : vector<8x32xf32>
    %cst_70 = arith.constant 9.99999974E-6 : f32
    %179 = vector.broadcast %cst_70 : f32 to vector<8x1xf32>
    %180 = arith.addf %176, %179 : vector<8x1xf32>
    %181 = math.rsqrt %180 : vector<8x1xf32>
    %182 = vector.broadcast %181 : vector<8x1xf32> to vector<8x32xf32>
    %183 = arith.mulf %178, %182 : vector<8x32xf32>
    %184 = vector.broadcast %164 : vector<1x32xf32> to vector<8x32xf32>
    %185 = arith.mulf %183, %184 : vector<8x32xf32>
    %186 = vector.broadcast %165 : vector<1x32xf32> to vector<8x32xf32>
    %187 = arith.addf %185, %186 : vector<8x32xf32>
    %cst_71 = arith.constant 0.000000e+00 : f32
    %188 = vector.broadcast %cst_71 : f32 to vector<8x32xf32>
    %189 = arith.maximumf %187, %188 : vector<8x32xf32>
    %c336 = arith.constant 336 : index
    %c0_72 = arith.constant 0 : index
    %190 = vector.load %arg3[%c336, %c0_72] : memref<496x128xf32, #tpu.memory_space<vmem>>, vector<32x1xf32>
    %cst_73 = arith.constant dense<0.000000e+00> : vector<8x1xf32>
    %191 = tpu.matmul %189, %190, %cst_73 {dimension_numbers = #tpu.dot_dimension_numbers<[1], [0], [0], [1], [0, 0, 1, 1], [], []>} : vector<8x32xf32>, vector<32x1xf32>, vector<8x1xf32> -> vector<8x1xf32>
    %c488 = arith.constant 488 : index
    %c0_74 = arith.constant 0 : index
    %192 = vector.load %arg3[%c488, %c0_74] : memref<496x128xf32, #tpu.memory_space<vmem>>, vector<1x1xf32>
    %193 = vector.broadcast %192 : vector<1x1xf32> to vector<8x1xf32>
    %194 = arith.addf %191, %193 : vector<8x1xf32>
    %c0_75 = arith.constant 0 : index
    %c0_76 = arith.constant 0 : index
    %195 = vector.load %arg4[%c0_75, %c0_76] : memref<8x1xf32, #tpu.memory_space<vmem>>, vector<8x1xf32>
    tpu.vector_store %arg4[%c0_75, %c0_76], %194 {strides = array<i32>} : memref<8x1xf32, #tpu.memory_space<vmem>>, vector<8x1xf32>,
    return
  }
}

</mosaic_0001>

<llo_original>
// kernel: tabr_forward.1
$region0: #{tabr_forward.1}
  #allocation0 [shape = 'u32[]', space=smem, size = 0x4, offset = 0x4, fixed_abs, tag = 'smem constant byte address 0x4 - core index']
  #allocation1 [shape = 'u32[144,128]{1,0:T(1,128)}', space=vmem, size = 0x12000, scoped, tag = 'internal scratch']
  #allocation2 [shape = 'f32[40,16]{1,0:T(8,128)}', space=vmem, size = 0x5000, scoped, tag = 'scratch operand']
  %s0 = inlined_call_operand.vmem [shape: f32[8,16], index: 0, kind: input, shape index: {}]
  %s1 = inlined_call_operand.vmem [shape: f32[32,16], index: 1, kind: input, shape index: {}]
  %s2 = inlined_call_operand.vmem [shape: f32[1,32], index: 2, kind: input, shape index: {}]
  %s3 = inlined_call_operand.hbm [shape: f32[496,128], index: 3, kind: input, shape index: {}]
  %s4 = inlined_call_operand.vmem [shape: f32[8,1], index: 4, kind: output, shape index: {}]
  %s5 = sld [smem:[#allocation0]]
  $region30: #{tabr_forward.1} parent=0
    _
  %s7 = ssub.s32 1, %s5
  %s8 = scalar_select 0, %s7, %s5
  $region1: #{tabr_forward.1} parent=0
    #allocation3 [shape = 'u8[253952]{0}', space=vmem, size = 0x3e000, scoped, tag = 'input window, operand 3, single buffered']
    #allocation4 [shape = 's32[1]{0}', space=sflag, size = 0x4, scoped, tag = 'scoped memory for tabr_forward.1']
    %9 = vsyncpa [#allocation4], 0
    // Predicated region
    $region2: #{tabr_forward.1} parent=1 // pred_check
      _
    $region3: #{tabr_forward.1} parent=1 // pred_check_branch
      %11 = sbr.rel (0) target = $region5
    $region4: #{tabr_forward.1} parent=1 // pred_region
      _
    $region5: #{tabr_forward.1} parent=1 // pred_fallthru
      _
    // Predicated region
    $region6: #{tabr_forward.1} parent=1 // pred_check
      _
    $region7: #{tabr_forward.1} parent=1 // pred_check_branch
      %13 = sbr.rel (0) target = $region9
    $region8: #{tabr_forward.1} parent=1 // pred_region
      _
    $region9: #{tabr_forward.1} parent=1 // pred_fallthru
      _
    // Predicated region
    $region10: #{tabr_forward.1} parent=1 // pred_check
      _
    $region11: #{tabr_forward.1} parent=1 // pred_check_branch
      %15 = sbr.rel (0) target = $region13
    $region12: #{tabr_forward.1} parent=1 // pred_region
      _
    $region13: #{tabr_forward.1} parent=1 // pred_fallthru
      _
    // Predicated region
    $region14: #{tabr_forward.1} parent=1 // pred_check
      _
    $region15: #{tabr_forward.1} parent=1 // pred_check_branch
      %17 = sbr.rel (0) target = $region17
    $region16: #{tabr_forward.1} parent=1 // pred_region
      %s19 = ssub.s32 7936, 7936
      %20 = vsyncadd [#allocation4], %s19
      %s21 = sshll.u32 [#allocation3], 4
      %s22 = int_to_ptr.vmem [resolvable:$true] %s21
      %27 = dma.hbm_to_vmem [thread:$0]  %s3, 7936, %s22, [#allocation4], 128, 128, 8
    $region17: #{tabr_forward.1} parent=1 // pred_fallthru
      _
    // Predicated region
    $region18: #{tabr_forward.1} parent=1 // pred_check
      _
    $region19: #{tabr_forward.1} parent=1 // pred_check_branch
      %29 = sbr.rel (0) target = $region21
    $region20: #{tabr_forward.1} parent=1 // pred_region
      %30 = dma.done [#allocation4], 7936
    $region21: #{tabr_forward.1} parent=1 // pred_fallthru
      _
    %v31 = vld [vmem:[%s0] sm:$0xff]
    %vm32 = vcmask 130048
    %33 = vst.msk [vmem:[#allocation2] sm:$0xff] %vm32, %v31
    %v34 = vld [vmem:[%s1] sm:$0xff]
    %v35 = vld [vmem:[%s1 + $0x8] sm:$0xff]
    %v36 = vld [vmem:[%s1 + $0x10] sm:$0xff]
    %v37 = vld [vmem:[%s1 + $0x18] sm:$0xff]
    %38 = vst.msk [vmem:[#allocation2 + $0x8] sm:$0xff] %vm32, %v34
    %39 = vst.msk [vmem:[#allocation2 + $0x10] sm:$0xff] %vm32, %v35
    %40 = vst.msk [vmem:[#allocation2 + $0x18] sm:$0xff] %vm32, %v36
    %41 = vst.msk [vmem:[#allocation2 + $0x20] sm:$0xff] %vm32, %v37
    %v42 = vld [vmem:[#allocation2] sm:$0xff]
    %v43 = vld [vmem:[#allocation2 + $0x8] sm:$0xff]
    %v44 = vld [vmem:[#allocation2 + $0x10] sm:$0xff]
    %v45 = vld [vmem:[#allocation2 + $0x18] sm:$0xff]
    %v46 = vld [vmem:[#allocation2 + $0x20] sm:$0xff]
    %v47 = vld [vmem:[#allocation3] sm:$0xff]
    %v48 = vld [vmem:[#allocation3 + $0x8] sm:$0xff]
    %v49 = vld [vmem:[#allocation3 + $0x170] sm:$0x1]
    %v50 = vlaneseq
    %v51 = vshrl.u32 %v50, 7
    %v52 = vsub.s32 0, %v51
    %v53 = vrot.slane %v49, %v52
    %v55 = vsel %vm32, %v42, 0
    %v58 = vsel %vm32, %v43, 0
    %v61 = vsel %vm32, %v44, 0
    %v64 = vsel %vm32, %v45, 0
    %v67 = vsel %vm32, %v46, 0
    %69 = vmatprep.subr.mxu0 0.0
    %70 = vmatpush1.msra.mxu0 %v47
    %71 = vmatprep.subr.mxu0 0.0
    %72 = vmatpush1.msra.mxu0 %v48
    %73 = vmatprep.subr.mxu0 0.0
    %74 = vmatpush1.msra.mxu0 0.0
    %75 = vmatprep.subr.mxu0 0.0
    %76 = vmatpush1.msra.mxu0 0.0
    %77 = vmatprep.subr.mxu0 0.0
    %78 = vmatpush1.msra.mxu0 0.0
    %79 = vmatprep.subr.mxu0 0.0
    %80 = vmatpush1.msra.mxu0 0.0
    %81 = vmatprep.subr.mxu0 0.0
    %82 = vmatpush1.msra.mxu0 0.0
    %83 = vmatprep.subr.mxu0 0.0
    %84 = vmatpush1.msra.mxu0 0.0
    %85 = vmatprep.subr.mxu0 0.0
    %86 = vmatpush1.msra.mxu0 0.0
    %87 = vmatprep.subr.mxu0 0.0
    %88 = vmatpush1.msra.mxu0 0.0
    %89 = vmatprep.subr.mxu0 0.0
    %90 = vmatpush1.msra.mxu0 0.0
    %91 = vmatprep.subr.mxu0 0.0
    %92 = vmatpush1.msra.mxu0 0.0
    %93 = vmatprep.subr.mxu0 0.0
    %94 = vmatpush1.msra.mxu0 0.0
    %95 = vmatprep.subr.mxu0 0.0
    %96 = vmatpush1.msra.mxu0 0.0
    %97 = vmatprep.subr.mxu0 0.0
    %98 = vmatpush1.msra.mxu0 0.0
    %99 = vmatprep.subr.mxu0 0.0
    %100 = vmatpush1.msra.mxu0 0.0
    %101 = vmatprep.subr.mxu0 0.0
    %102 = vmatpush1.msra.mxu0 0.0
    %103 = vmatprep.subr.mxu0 0.0
    %104 = vmatpush1.msra.mxu0 0.0
    %105 = vmatprep.subr.mxu0 0.0
    %106 = vmatpush1.msra.mxu0 0.0
    %107 = vmatprep.subr.mxu0 0.0
    %108 = vmatpush1.msra.mxu0 0.0
    %109 = vmatprep.subr.mxu0 0.0
    %110 = vmatpush1.msra.mxu0 0.0
    %111 = vmatprep.subr.mxu0 0.0
    %112 = vmatpush1.msra.mxu0 0.0
    %113 = vmatprep.subr.mxu0 0.0
    %114 = vmatpush1.msra.mxu0 0.0
    %115 = vmatprep.subr.mxu0 0.0
    %116 = vmatpush1.msra.mxu0 0.0
    %117 = vmatprep.subr.mxu0 0.0
    %118 = vmatpush1.msra.mxu0 0.0
    %119 = vmatprep.subr.mxu0 0.0
    %120 = vmatpush1.msra.mxu0 0.0
    %121 = vmatprep.subr.mxu0 0.0
    %122 = vmatpush1.msra.mxu0 0.0
    %123 = vmatprep.subr.mxu0 0.0
    %124 = vmatpush1.msra.mxu0 0.0
    %125 = vmatprep.subr.mxu0 0.0
    %126 = vmatpush1.msra.mxu0 0.0
    %127 = vmatprep.subr.mxu0 0.0
    %128 = vmatpush1.msra.mxu0 0.0
    %129 = vmatprep.subr.mxu0 0.0
    %130 = vmatpush1.msra.mxu0 0.0
    %131 = vmatprep.subr.mxu0 0.0
    %132 = vmatpush1.msra.mxu0 0.0
    %133 = vmatprep.mubr.f32.mxu0 0.0
    %134 = vmatmul.mubr.f32.gmra.mrb[0].mxu0 %v55
    %v135 = vpop.f32.mrb[0].mxu0
    %v136 = vadd.f32 %v53, %v135
    %v137 = vpop.f32.mrb[0].mxu0
    %138 = vmatprep.mubr.f32.mxu0 0.0
    %139 = vmatmul.mubr.f32.gmra.mrb[0].mxu0 %v58
    %v140 = vpop.f32.mrb[0].mxu0
    %v141 = vadd.f32 %v53, %v140
    %v142 = vpop.f32.mrb[0].mxu0
    %143 = vmatprep.mubr.f32.mxu0 0.0
    %144 = vmatmul.mubr.f32.gmra.mrb[0].mxu0 %v61
    %v145 = vpop.f32.mrb[0].mxu0
    %v146 = vadd.f32 %v53, %v145
    %v147 = vpop.f32.mrb[0].mxu0
    %148 = vmatprep.mubr.f32.mxu0 0.0
    %149 = vmatmul.mubr.f32.gmra.mrb[0].mxu0 %v64
    %v150 = vpop.f32.mrb[0].mxu0
    %v151 = vadd.f32 %v53, %v150
    %v152 = vpop.f32.mrb[0].mxu0
    %153 = vmatprep.mubr.f32.mxu0 0.0
    %154 = vmatmul.mubr.f32.gmra.mrb[0].mxu0 %v67
    %v155 = vpop.f32.mrb[0].mxu0
    %v156 = vadd.f32 %v53, %v155
    %v157 = vpop.f32.mrb[0].mxu0
    %158 = vdwg.mxu0
    %v159 = vld [vmem:[#allocation3 + $0x10] sm:$0xff]
    %v160 = vld [vmem:[#allocation3 + $0x18] sm:$0xff]
    %v161 = vld [vmem:[#allocation3 + $0x20] sm:$0xff]
    %v162 = vld [vmem:[#allocation3 + $0x28] sm:$0xff]
    %v163 = vld [vmem:[#allocation3 + $0x178] sm:$0x1]
    %v164 = vlaneseq
    %v165 = vshrl.u32 %v164, 7
    %v166 = vsub.s32 0, %v165
    %v167 = vrot.slane %v163, %v166
    %vm168 = vcmask 261120
    %v170 = vsel %vm168, %v136, 0
    %v173 = vsel %vm168, %v141, 0
    %v176 = vsel %vm168, %v146, 0
    %v179 = vsel %vm168, %v151, 0
    %v182 = vsel %vm168, %v156, 0
    %184 = vmatprep.subr.mxu0 0.0
    %185 = vmatpush1.msra.mxu0 %v159
    %186 = vmatprep.subr.mxu0 0.0
    %187 = vmatpush1.msra.mxu0 %v160
    %188 = vmatprep.subr.mxu0 0.0
    %189 = vmatpush1.msra.mxu0 %v161
    %190 = vmatprep.subr.mxu0 0.0
    %191 = vmatpush1.msra.mxu0 %v162
    %192 = vmatprep.subr.mxu0 0.0
    %193 = vmatpush1.msra.mxu0 0.0
    %194 = vmatprep.subr.mxu0 0.0
    %195 = vmatpush1.msra.mxu0 0.0
    %196 = vmatprep.subr.mxu0 0.0
    %197 = vmatpush1.msra.mxu0 0.0
    %198 = vmatprep.subr.mxu0 0.0
    %199 = vmatpush1.msra.mxu0 0.0
    %200 = vmatprep.subr.mxu0 0.0
    %201 = vmatpush1.msra.mxu0 0.0
    %202 = vmatprep.subr.mxu0 0.0
    %203 = vmatpush1.msra.mxu0 0.0
    %204 = vmatprep.subr.mxu0 0.0
    %205 = vmatpush1.msra.mxu0 0.0
    %206 = vmatprep.subr.mxu0 0.0
    %207 = vmatpush1.msra.mxu0 0.0
    %208 = vmatprep.subr.mxu0 0.0
    %209 = vmatpush1.msra.mxu0 0.0
    %210 = vmatprep.subr.mxu0 0.0
    %211 = vmatpush1.msra.mxu0 0.0
    %212 = vmatprep.subr.mxu0 0.0
    %213 = vmatpush1.msra.mxu0 0.0
    %214 = vmatprep.subr.mxu0 0.0
    %215 = vmatpush1.msra.mxu0 0.0
    %216 = vmatprep.subr.mxu0 0.0
    %217 = vmatpush1.msra.mxu0 0.0
    %218 = vmatprep.subr.mxu0 0.0
    %219 = vmatpush1.msra.mxu0 0.0
    %220 = vmatprep.subr.mxu0 0.0
    %221 = vmatpush1.msra.mxu0 0.0
    %222 = vmatprep.subr.mxu0 0.0
    %223 = vmatpush1.msra.mxu0 0.0
    %224 = vmatprep.subr.mxu0 0.0
    %225 = vmatpush1.msra.mxu0 0.0
    %226 = vmatprep.subr.mxu0 0.0
    %227 = vmatpush1.msra.mxu0 0.0
    %228 = vmatprep.subr.mxu0 0.0
    %229 = vmatpush1.msra.mxu0 0.0
    %230 = vmatprep.subr.mxu0 0.0
    %231 = vmatpush1.msra.mxu0 0.0
    %232 = vmatprep.subr.mxu0 0.0
    %233 = vmatpush1.msra.mxu0 0.0
    %234 = vmatprep.subr.mxu0 0.0
    %235 = vmatpush1.msra.mxu0 0.0
    %236 = vmatprep.subr.mxu0 0.0
    %237 = vmatpush1.msra.mxu0 0.0
    %238 = vmatprep.subr.mxu0 0.0
    %239 = vmatpush1.msra.mxu0 0.0
    %240 = vmatprep.subr.mxu0 0.0
    %241 = vmatpush1.msra.mxu0 0.0
    %242 = vmatprep.subr.mxu0 0.0
    %243 = vmatpush1.msra.mxu0 0.0
    %244 = vmatprep.subr.mxu0 0.0
    %245 = vmatpush1.msra.mxu0 0.0
    %246 = vmatprep.subr.mxu0 0.0
    %247 = vmatpush1.msra.mxu0 0.0
    %248 = vmatprep.mubr.f32.mxu0 0.0
    %249 = vmatmul.mubr.f32.gmra.mrb[0].mxu0 %v170
    %v250 = vpop.f32.mrb[0].mxu0
    %v251 = vadd.f32 %v167, %v250
    %v252 = vpop.f32.mrb[0].mxu0
    %253 = vmatprep.mubr.f32.mxu0 0.0
    %254 = vmatmul.mubr.f32.gmra.mrb[0].mxu0 %v173
    %v255 = vpop.f32.mrb[0].mxu0
    %v256 = vadd.f32 %v167, %v255
    %v257 = vpop.f32.mrb[0].mxu0
    %258 = vmatprep.mubr.f32.mxu0 0.0
    %259 = vmatmul.mubr.f32.gmra.mrb[0].mxu0 %v176
    %v260 = vpop.f32.mrb[0].mxu0
    %v261 = vadd.f32 %v167, %v260
    %v262 = vpop.f32.mrb[0].mxu0
    %263 = vmatprep.mubr.f32.mxu0 0.0
    %264 = vmatmul.mubr.f32.gmra.mrb[0].mxu0 %v179
    %v265 = vpop.f32.mrb[0].mxu0
    %v266 = vadd.f32 %v167, %v265
    %v267 = vpop.f32.mrb[0].mxu0
    %268 = vmatprep.mubr.f32.mxu0 0.0
    %269 = vmatmul.mubr.f32.gmra.mrb[0].mxu0 %v182
    %v270 = vpop.f32.mrb[0].mxu0
    %v271 = vadd.f32 %v167, %v270
    %v272 = vpop.f32.mrb[0].mxu0
    %273 = vdwg.mxu0
    %v274 = vmax.f32 %v251, 0.0
    %v275 = vmax.f32 %v256, 0.0
    %v276 = vmax.f32 %v261, 0.0
    %v277 = vmax.f32 %v266, 0.0
    %v278 = vmax.f32 %v271, 0.0
    %v279 = vld [vmem:[#allocation3 + $0x30] sm:$0xff]
    %v280 = vld [vmem:[#allocation3 + $0x38] sm:$0xff]
    %v281 = vld [vmem:[#allocation3 + $0x40] sm:$0xff]
    %v282 = vld [vmem:[#allocation3 + $0x48] sm:$0xff]
    %v283 = vld [vmem:[#allocation3 + $0x50] sm:$0xff]
    %v284 = vld [vmem:[#allocation3 + $0x58] sm:$0xff]
    %v285 = vld [vmem:[#allocation3 + $0x60] sm:$0xff]
    %v286 = vld [vmem:[#allocation3 + $0x68] sm:$0xff]
    %vm287 = vcmask 523264
    %v289 = vsel %vm287, %v274, 0
    %v292 = vsel %vm287, %v275, 0
    %v295 = vsel %vm287, %v276, 0
    %v298 = vsel %vm287, %v277, 0
    %v301 = vsel %vm287, %v278, 0
    %303 = vmatprep.subr.mxu0 0.0
    %304 = vmatpush1.msra.mxu0 %v279
    %305 = vmatprep.subr.mxu0 0.0
    %306 = vmatpush1.msra.mxu0 %v280
    %307 = vmatprep.subr.mxu0 0.0
    %308 = vmatpush1.msra.mxu0 %v281
    %309 = vmatprep.subr.mxu0 0.0
    %310 = vmatpush1.msra.mxu0 %v282
    %311 = vmatprep.subr.mxu0 0.0
    %312 = vmatpush1.msra.mxu0 %v283
    %313 = vmatprep.subr.mxu0 0.0
    %314 = vmatpush1.msra.mxu0 %v284
    %315 = vmatprep.subr.mxu0 0.0
    %316 = vmatpush1.msra.mxu0 %v285
    %317 = vmatprep.subr.mxu0 0.0
    %318 = vmatpush1.msra.mxu0 %v286
    %319 = vmatprep.subr.mxu0 0.0
    %320 = vmatpush1.msra.mxu0 0.0
    %321 = vmatprep.subr.mxu0 0.0
    %322 = vmatpush1.msra.mxu0 0.0
    %323 = vmatprep.subr.mxu0 0.0
    %324 = vmatpush1.msra.mxu0 0.0
    %325 = vmatprep.subr.mxu0 0.0
    %326 = vmatpush1.msra.mxu0 0.0
    %327 = vmatprep.subr.mxu0 0.0
    %328 = vmatpush1.msra.mxu0 0.0
    %329 = vmatprep.subr.mxu0 0.0
    %330 = vmatpush1.msra.mxu0 0.0
    %331 = vmatprep.subr.mxu0 0.0
    %332 = vmatpush1.msra.mxu0 0.0
    %333 = vmatprep.subr.mxu0 0.0
    %334 = vmatpush1.msra.mxu0 0.0
    %335 = vmatprep.subr.mxu0 0.0
    %336 = vmatpush1.msra.mxu0 0.0
    %337 = vmatprep.subr.mxu0 0.0
    %338 = vmatpush1.msra.mxu0 0.0
    %339 = vmatprep.subr.mxu0 0.0
    %340 = vmatpush1.msra.mxu0 0.0
    %341 = vmatprep.subr.mxu0 0.0
    %342 = vmatpush1.msra.mxu0 0.0
    %343 = vmatprep.subr.mxu0 0.0
    %344 = vmatpush1.msra.mxu0 0.0
    %345 = vmatprep.subr.mxu0 0.0
    %346 = vmatpush1.msra.mxu0 0.0
    %347 = vmatprep.subr.mxu0 0.0
    %348 = vmatpush1.msra.mxu0 0.0
    %349 = vmatprep.subr.mxu0 0.0
    %350 = vmatpush1.msra.mxu0 0.0
    %351 = vmatprep.subr.mxu0 0.0
    %352 = vmatpush1.msra.mxu0 0.0
    %353 = vmatprep.subr.mxu0 0.0
    %354 = vmatpush1.msra.mxu0 0.0
    %355 = vmatprep.subr.mxu0 0.0
    %356 = vmatpush1.msra.mxu0 0.0
    %357 = vmatprep.subr.mxu0 0.0
    %358 = vmatpush1.msra.mxu0 0.0
    %359 = vmatprep.subr.mxu0 0.0
    %360 = vmatpush1.msra.mxu0 0.0
    %361 = vmatprep.subr.mxu0 0.0
    %362 = vmatpush1.msra.mxu0 0.0
    %363 = vmatprep.subr.mxu0 0.0
    %364 = vmatpush1.msra.mxu0 0.0
    %365 = vmatprep.subr.mxu0 0.0
    %366 = vmatpush1.msra.mxu0 0.0
    %367 = vmatprep.mubr.f32.mxu0 0.0
    %368 = vmatmul.mubr.f32.gmra.mrb[0].mxu0 %v289
    %v369 = vpop.f32.mrb[0].mxu0
    %v370 = vadd.f32 0.0, %v369
    %v371 = vpop.f32.mrb[0].mxu0
    %372 = vmatprep.mubr.f32.mxu0 0.0
    %373 = vmatmul.mubr.f32.gmra.mrb[0].mxu0 %v292
    %v374 = vpop.f32.mrb[0].mxu0
    %v375 = vadd.f32 0.0, %v374
    %v376 = vpop.f32.mrb[0].mxu0
    %377 = vmatprep.mubr.f32.mxu0 0.0
    %378 = vmatmul.mubr.f32.gmra.mrb[0].mxu0 %v295
    %v379 = vpop.f32.mrb[0].mxu0
    %v380 = vadd.f32 0.0, %v379
    %v381 = vpop.f32.mrb[0].mxu0
    %382 = vmatprep.mubr.f32.mxu0 0.0
    %383 = vmatmul.mubr.f32.gmra.mrb[0].mxu0 %v298
    %v384 = vpop.f32.mrb[0].mxu0
    %v385 = vadd.f32 0.0, %v384
    %v386 = vpop.f32.mrb[0].mxu0
    %387 = vmatprep.mubr.f32.mxu0 0.0
    %388 = vmatmul.mubr.f32.gmra.mrb[0].mxu0 %v301
    %v389 = vpop.f32.mrb[0].mxu0
    %v390 = vadd.f32 0.0, %v389
    %v391 = vpop.f32.mrb[0].mxu0
    %392 = vdwg.mxu0
    %v393 = vadd.f32 %v136, %v370
    %v394 = vadd.f32 %v141, %v375
    %v395 = vadd.f32 %v146, %v380
    %v396 = vadd.f32 %v151, %v385
    %v397 = vadd.f32 %v156, %v390
    %v398 = vld [vmem:[#allocation3 + $0x180] sm:$0x1]
    %v399 = vlaneseq
    %v400 = vshrl.u32 %v399, 7
    %v401 = vsub.s32 0, %v400
    %v402 = vrot.slane %v398, %v401
    %v403 = vadd.f32 %v393, %v402
    %v404 = vadd.f32 %v394, %v402
    %v405 = vadd.f32 %v395, %v402
    %v406 = vadd.f32 %v396, %v402
    %v407 = vadd.f32 %v397, %v402
    %v408 = vld [vmem:[#allocation3 + $0x188] sm:$0x1]
    %v409 = vld [vmem:[#allocation3 + $0x190] sm:$0x1]
    %v410 = vsel %vm168, %v403, 0.0
    %411 = vadd.xlane.f32.xlu0 %v410
    %v412 = vpop.xlane.xlu0 %411
    %v413 = vsel %vm168, %v404, 0.0
    %414 = vadd.xlane.f32.xlu0 %v413
    %v415 = vpop.xlane.xlu0 %414
    %v416 = vsel %vm168, %v405, 0.0
    %417 = vadd.xlane.f32.xlu0 %v416
    %v418 = vpop.xlane.xlu0 %417
    %v419 = vsel %vm168, %v406, 0.0
    %420 = vadd.xlane.f32.xlu0 %v419
    %v421 = vpop.xlane.xlu0 %420
    %v422 = vsel %vm168, %v407, 0.0
    %423 = vadd.xlane.f32.xlu0 %v422
    %v424 = vpop.xlane.xlu0 %423
    %v425 = vrcp.pop 32.0
    %v426 = vmul.f32 %v412, %v425
    %v427 = vmul.f32 %v415, %v425
    %v428 = vmul.f32 %v418, %v425
    %v429 = vmul.f32 %v421, %v425
    %v430 = vmul.f32 %v424, %v425
    %v431 = vsub.f32 %v403, %v426
    %v432 = vsub.f32 %v404, %v427
    %v433 = vsub.f32 %v405, %v428
    %v434 = vsub.f32 %v406, %v429
    %v435 = vsub.f32 %v407, %v430
    %v436 = vmul.f32 %v431, %v431
    %v437 = vmul.f32 %v432, %v432
    %v438 = vmul.f32 %v433, %v433
    %v439 = vmul.f32 %v434, %v434
    %v440 = vmul.f32 %v435, %v435
    %v441 = vsel %vm168, %v436, 0.0
    %442 = vadd.xlane.f32.xlu0 %v441
    %v443 = vpop.xlane.xlu0 %442
    %v444 = vsel %vm168, %v437, 0.0
    %445 = vadd.xlane.f32.xlu0 %v444
    %v446 = vpop.xlane.xlu0 %445
    %v447 = vsel %vm168, %v438, 0.0
    %448 = vadd.xlane.f32.xlu0 %v447
    %v449 = vpop.xlane.xlu0 %448
    %v450 = vsel %vm168, %v439, 0.0
    %451 = vadd.xlane.f32.xlu0 %v450
    %v452 = vpop.xlane.xlu0 %451
    %v453 = vsel %vm168, %v440, 0.0
    %454 = vadd.xlane.f32.xlu0 %v453
    %v455 = vpop.xlane.xlu0 %454
    %v456 = vmul.f32 %v443, %v425
    %v457 = vmul.f32 %v446, %v425
    %v458 = vmul.f32 %v449, %v425
    %v459 = vmul.f32 %v452, %v425
    %v460 = vmul.f32 %v455, %v425
    %v461 = vadd.f32 %v456, 1e-05
    %v462 = vadd.f32 %v457, 1e-05
    %v463 = vadd.f32 %v458, 1e-05
    %v464 = vadd.f32 %v459, 1e-05
    %v465 = vadd.f32 %v460, 1e-05
    %v466 = vrsqrt.pop %v461
    %v467 = vrsqrt.pop %v462
    %v468 = vrsqrt.pop %v463
    %v469 = vrsqrt.pop %v464
    %v470 = vrsqrt.pop %v465
    %v471 = vmul.f32 %v431, %v466
    %v472 = vmul.f32 %v432, %v467
    %v473 = vmul.f32 %v433, %v468
    %v474 = vmul.f32 %v434, %v469
    %v475 = vmul.f32 %v435, %v470
    %v476 = vlaneseq
    %v477 = vshrl.u32 %v476, 7
    %v478 = vsub.s32 0, %v477
    %v479 = vrot.slane %v408, %v478
    %v480 = vmul.f32 %v471, %v479
    %v481 = vmul.f32 %v472, %v479
    %v482 = vmul.f32 %v473, %v479
    %v483 = vmul.f32 %v474, %v479
    %v484 = vmul.f32 %v475, %v479
    %v485 = vlaneseq
    %v486 = vshrl.u32 %v485, 7
    %v487 = vsub.s32 0, %v486
    %v488 = vrot.slane %v409, %v487
    %v489 = vadd.f32 %v480, %v488
    %v490 = vadd.f32 %v481, %v488
    %v491 = vadd.f32 %v482, %v488
    %v492 = vadd.f32 %v483, %v488
    %v493 = vadd.f32 %v484, %v488
    %v494 = vld [vmem:[#allocation3 + $0x70] sm:$0xff]
    %v495 = vld [vmem:[#allocation3 + $0x78] sm:$0xff]
    %v496 = vld [vmem:[#allocation3 + $0x80] sm:$0xff]
    %v497 = vld [vmem:[#allocation3 + $0x88] sm:$0xff]
    %v498 = vld [vmem:[#allocation3 + $0x198] sm:$0x1]
    %v499 = vlaneseq
    %v500 = vshrl.u32 %v499, 7
    %v501 = vsub.s32 0, %v500
    %v502 = vrot.slane %v498, %v501
    %v504 = vsel %vm168, %v489, 0
    %v507 = vsel %vm168, %v490, 0
    %v510 = vsel %vm168, %v491, 0
    %v513 = vsel %vm168, %v492, 0
    %v516 = vsel %vm168, %v493, 0
    %518 = vmatprep.subr.mxu0 0.0
    %519 = vmatpush1.msra.mxu0 %v494
    %520 = vmatprep.subr.mxu0 0.0
    %521 = vmatpush1.msra.mxu0 %v495
    %522 = vmatprep.subr.mxu0 0.0
    %523 = vmatpush1.msra.mxu0 %v496
    %524 = vmatprep.subr.mxu0 0.0
    %525 = vmatpush1.msra.mxu0 %v497
    %526 = vmatprep.subr.mxu0 0.0
    %527 = vmatpush1.msra.mxu0 0.0
    %528 = vmatprep.subr.mxu0 0.0
    %529 = vmatpush1.msra.mxu0 0.0
    %530 = vmatprep.subr.mxu0 0.0
    %531 = vmatpush1.msra.mxu0 0.0
    %532 = vmatprep.subr.mxu0 0.0
    %533 = vmatpush1.msra.mxu0 0.0
    %534 = vmatprep.subr.mxu0 0.0
    %535 = vmatpush1.msra.mxu0 0.0
    %536 = vmatprep.subr.mxu0 0.0
    %537 = vmatpush1.msra.mxu0 0.0
    %538 = vmatprep.subr.mxu0 0.0
    %539 = vmatpush1.msra.mxu0 0.0
    %540 = vmatprep.subr.mxu0 0.0
    %541 = vmatpush1.msra.mxu0 0.0
    %542 = vmatprep.subr.mxu0 0.0
    %543 = vmatpush1.msra.mxu0 0.0
    %544 = vmatprep.subr.mxu0 0.0
    %545 = vmatpush1.msra.mxu0 0.0
    %546 = vmatprep.subr.mxu0 0.0
    %547 = vmatpush1.msra.mxu0 0.0
    %548 = vmatprep.subr.mxu0 0.0
    %549 = vmatpush1.msra.mxu0 0.0
    %550 = vmatprep.subr.mxu0 0.0
    %551 = vmatpush1.msra.mxu0 0.0
    %552 = vmatprep.subr.mxu0 0.0
    %553 = vmatpush1.msra.mxu0 0.0
    %554 = vmatprep.subr.mxu0 0.0
    %555 = vmatpush1.msra.mxu0 0.0
    %556 = vmatprep.subr.mxu0 0.0
    %557 = vmatpush1.msra.mxu0 0.0
    %558 = vmatprep.subr.mxu0 0.0
    %559 = vmatpush1.msra.mxu0 0.0
    %560 = vmatprep.subr.mxu0 0.0
    %561 = vmatpush1.msra.mxu0 0.0
    %562 = vmatprep.subr.mxu0 0.0
    %563 = vmatpush1.msra.mxu0 0.0
    %564 = vmatprep.subr.mxu0 0.0
    %565 = vmatpush1.msra.mxu0 0.0
    %566 = vmatprep.subr.mxu0 0.0
    %567 = vmatpush1.msra.mxu0 0.0
    %568 = vmatprep.subr.mxu0 0.0
    %569 = vmatpush1.msra.mxu0 0.0
    %570 = vmatprep.subr.mxu0 0.0
    %571 = vmatpush1.msra.mxu0 0.0
    %572 = vmatprep.subr.mxu0 0.0
    %573 = vmatpush1.msra.mxu0 0.0
    %574 = vmatprep.subr.mxu0 0.0
    %575 = vmatpush1.msra.mxu0 0.0
    %576 = vmatprep.subr.mxu0 0.0
    %577 = vmatpush1.msra.mxu0 0.0
    %578 = vmatprep.subr.mxu0 0.0
    %579 = vmatpush1.msra.mxu0 0.0
    %580 = vmatprep.subr.mxu0 0.0
    %581 = vmatpush1.msra.mxu0 0.0
    %582 = vmatprep.mubr.f32.mxu0 0.0
    %583 = vmatmul.mubr.f32.gmra.mrb[0].mxu0 %v504
    %v584 = vpop.f32.mrb[0].mxu0
    %v585 = vadd.f32 %v502, %v584
    %v586 = vpop.f32.mrb[0].mxu0
    %587 = vmatprep.mubr.f32.mxu0 0.0
    %588 = vmatmul.mubr.f32.gmra.mrb[0].mxu0 %v507
    %v589 = vpop.f32.mrb[0].mxu0
    %v590 = vadd.f32 %v502, %v589
    %v591 = vpop.f32.mrb[0].mxu0
    %592 = vmatprep.mubr.f32.mxu0 0.0
    %593 = vmatmul.mubr.f32.gmra.mrb[0].mxu0 %v510
    %v594 = vpop.f32.mrb[0].mxu0
    %v595 = vadd.f32 %v502, %v594
    %v596 = vpop.f32.mrb[0].mxu0
    %597 = vmatprep.mubr.f32.mxu0 0.0
    %598 = vmatmul.mubr.f32.gmra.mrb[0].mxu0 %v513
    %v599 = vpop.f32.mrb[0].mxu0
    %v600 = vadd.f32 %v502, %v599
    %v601 = vpop.f32.mrb[0].mxu0
    %602 = vmatprep.mubr.f32.mxu0 0.0
    %603 = vmatmul.mubr.f32.gmra.mrb[0].mxu0 %v516
    %v604 = vpop.f32.mrb[0].mxu0
    %v605 = vadd.f32 %v502, %v604
    %v606 = vpop.f32.mrb[0].mxu0
    %607 = vdwg.mxu0
    %v609 = vsel %vm168, %v585, 0
    %v612 = vsel %vm168, %v590, 0
    %v615 = vsel %vm168, %v595, 0
    %v618 = vsel %vm168, %v600, 0
    %v621 = vsel %vm168, %v605, 0
    %623 = vmatprep.subr.mxu0 0.0
    %624 = vmatpush1.xpose.msra.mxu0 %v612
    %625 = vmatprep.subr.mxu0 0.0
    %626 = vmatpush1.xpose.msra.mxu0 %v615
    %627 = vmatprep.subr.mxu0 0.0
    %628 = vmatpush1.xpose.msra.mxu0 %v618
    %629 = vmatprep.subr.mxu0 0.0
    %630 = vmatpush1.xpose.msra.mxu0 %v621
    %631 = vmatprep.subr.mxu0 0.0
    %632 = vmatpush1.xpose.msra.mxu0 0.0
    %633 = vmatprep.subr.mxu0 0.0
    %634 = vmatpush1.xpose.msra.mxu0 0.0
    %635 = vmatprep.subr.mxu0 0.0
    %636 = vmatpush1.xpose.msra.mxu0 0.0
    %637 = vmatprep.subr.mxu0 0.0
    %638 = vmatpush1.xpose.msra.mxu0 0.0
    %639 = vmatprep.subr.mxu0 0.0
    %640 = vmatpush1.xpose.msra.mxu0 0.0
    %641 = vmatprep.subr.mxu0 0.0
    %642 = vmatpush1.xpose.msra.mxu0 0.0
    %643 = vmatprep.subr.mxu0 0.0
    %644 = vmatpush1.xpose.msra.mxu0 0.0
    %645 = vmatprep.subr.mxu0 0.0
    %646 = vmatpush1.xpose.msra.mxu0 0.0
    %647 = vmatprep.subr.mxu0 0.0
    %648 = vmatpush1.xpose.msra.mxu0 0.0
    %649 = vmatprep.subr.mxu0 0.0
    %650 = vmatpush1.xpose.msra.mxu0 0.0
    %651 = vmatprep.subr.mxu0 0.0
    %652 = vmatpush1.xpose.msra.mxu0 0.0
    %653 = vmatprep.subr.mxu0 0.0
    %654 = vmatpush1.xpose.msra.mxu0 0.0
    %655 = vmatprep.subr.mxu0 0.0
    %656 = vmatpush1.xpose.msra.mxu0 0.0
    %657 = vmatprep.subr.mxu0 0.0
    %658 = vmatpush1.xpose.msra.mxu0 0.0
    %659 = vmatprep.subr.mxu0 0.0
    %660 = vmatpush1.xpose.msra.mxu0 0.0
    %661 = vmatprep.subr.mxu0 0.0
    %662 = vmatpush1.xpose.msra.mxu0 0.0
    %663 = vmatprep.subr.mxu0 0.0
    %664 = vmatpush1.xpose.msra.mxu0 0.0
    %665 = vmatprep.subr.mxu0 0.0
    %666 = vmatpush1.xpose.msra.mxu0 0.0
    %667 = vmatprep.subr.mxu0 0.0
    %668 = vmatpush1.xpose.msra.mxu0 0.0
    %669 = vmatprep.subr.mxu0 0.0
    %670 = vmatpush1.xpose.msra.mxu0 0.0
    %671 = vmatprep.subr.mxu0 0.0
    %672 = vmatpush1.xpose.msra.mxu0 0.0
    %673 = vmatprep.subr.mxu0 0.0
    %674 = vmatpush1.xpose.msra.mxu0 0.0
    %675 = vmatprep.subr.mxu0 0.0
    %676 = vmatpush1.xpose.msra.mxu0 0.0
    %677 = vmatprep.subr.mxu0 0.0
    %678 = vmatpush1.xpose.msra.mxu0 0.0
    %679 = vmatprep.subr.mxu0 0.0
    %680 = vmatpush1.xpose.msra.mxu0 0.0
    %681 = vmatprep.subr.mxu0 0.0
    %682 = vmatpush1.xpose.msra.mxu0 0.0
    %683 = vmatprep.subr.mxu0 0.0
    %684 = vmatpush1.xpose.msra.mxu0 0.0
    %685 = vmatprep.subr.mxu0 0.0
    %686 = vmatpush1.xpose.msra.mxu0 0.0
    %687 = vmatprep.mubr.f32.mxu0 0.0
    %688 = vmatmul.mubr.f32.gmra.mrb[0].mxu0 %v609
    %v689 = vpop.f32.mrb[0].mxu0
    %v690 = vadd.f32 0.0, %v689
    %v691 = vpop.f32.mrb[0].mxu0
    %692 = vdwg.mxu0
    %v693 = vmul.f32 %v590, %v590
    %v694 = vmul.f32 %v595, %v595
    %v695 = vmul.f32 %v600, %v600
    %v696 = vmul.f32 %v605, %v605
    %v697 = vsel %vm168, %v693, 0.0
    %698 = vadd.xlane.f32.xlu0 %v697
    %v699 = vpop.xlane.xlu0 %698
    %v700 = vsel %vm168, %v694, 0.0
    %701 = vadd.xlane.f32.xlu0 %v700
    %v702 = vpop.xlane.xlu0 %701
    %v703 = vsel %vm168, %v695, 0.0
    %704 = vadd.xlane.f32.xlu0 %v703
    %v705 = vpop.xlane.xlu0 %704
    %v706 = vsel %vm168, %v696, 0.0
    %707 = vadd.xlane.f32.xlu0 %v706
    %v708 = vpop.xlane.xlu0 %707
    %v709 = vmul.f32 %v690, 2.0
    %v714 = vlaneseq
    %v715 = vand.u32 %v714, 127
    %v716 = vlaneseq
    %v717 = vshrl.u32 %v716, 7
    %v718 = vsub.s32 %v715, %v717
    %v719 = vrot.slane %v699, %v718
    %v720 = vadd.s32 %v715, 4294967288
    %v721 = vlaneseq
    %v722 = vshrl.u32 %v721, 7
    %v723 = vsub.s32 %v720, %v722
    %v724 = vrot.slane %v702, %v723
    %vm725 = vcmask 130112
    %v726 = vsel %vm725, %v724, %v719
    %v727 = vadd.s32 %v715, 4294967280
    %v728 = vlaneseq
    %v729 = vshrl.u32 %v728, 7
    %v730 = vsub.s32 %v727, %v729
    %v731 = vrot.slane %v705, %v730
    %vm732 = vcmask 195712
    %v733 = vsel %vm732, %v731, %v726
    %v734 = vadd.s32 %v715, 4294967272
    %v735 = vlaneseq
    %v736 = vshrl.u32 %v735, 7
    %v737 = vsub.s32 %v734, %v736
    %v738 = vrot.slane %v708, %v737
    %vm739 = vcmask 261312
    %v740 = vsel %vm739, %v738, %v733
    %vm741 = vcmask 1041409
    %vm742 = vcmask 1042434
    %v743 = vsel %vm742, %v740, %v740
    %vm744 = vcmask 1043459
    %v745 = vsel %vm744, %v740, %v743
    %vm746 = vcmask 1044484
    %v747 = vsel %vm746, %v740, %v745
    %vm748 = vcmask 1045509
    %v749 = vsel %vm748, %v740, %v747
    %vm750 = vcmask 1046534
    %v751 = vsel %vm750, %v740, %v749
    %vm752 = vcmask 1047559
    %v753 = vsel %vm752, %v740, %v751
    %v755 = vsub.f32 %v709, %v753
    %v756 = vlaneseq
    %v757 = vshrl.u32 %v756, 7
    %v758 = vsub.s32 0, %v757
    %v759 = vrot.slane %v755, %v758
    %761 = vbcast.lane.b32.xlu0 %v759, 256
    %v762 = vpop.permute.xlu0 %761
    %s764 = sor.u32 256, 8
    %765 = vbcast.lane.b32.xlu0 %v759, %s764
    %v766 = vpop.permute.xlu0 %765
    %s768 = sor.u32 256, 16
    %769 = vbcast.lane.b32.xlu0 %v759, %s768
    %v770 = vpop.permute.xlu0 %769
    %s772 = sor.u32 256, 24
    %773 = vbcast.lane.b32.xlu0 %v759, %s772
    %v774 = vpop.permute.xlu0 %773
    %v775 = vlaneseq
    %v776 = vshrl.u32 %v775, 7
    %v777 = vsub.s32 1, %v776
    %v778 = vrot.slane %v755, %v777
    %780 = vbcast.lane.b32.xlu0 %v778, 256
    %v781 = vpop.permute.xlu0 %780
    %s783 = sor.u32 256, 8
    %784 = vbcast.lane.b32.xlu0 %v778, %s783
    %v785 = vpop.permute.xlu0 %784
    %s787 = sor.u32 256, 16
    %788 = vbcast.lane.b32.xlu0 %v778, %s787
    %v789 = vpop.permute.xlu0 %788
    %s791 = sor.u32 256, 24
    %792 = vbcast.lane.b32.xlu0 %v778, %s791
    %v793 = vpop.permute.xlu0 %792
    %v794 = vlaneseq
    %v795 = vshrl.u32 %v794, 7
    %v796 = vsub.s32 2, %v795
    %v797 = vrot.slane %v755, %v796
    %799 = vbcast.lane.b32.xlu0 %v797, 256
    %v800 = vpop.permute.xlu0 %799
    %s802 = sor.u32 256, 8
    %803 = vbcast.lane.b32.xlu0 %v797, %s802
    %v804 = vpop.permute.xlu0 %803
    %s806 = sor.u32 256, 16
    %807 = vbcast.lane.b32.xlu0 %v797, %s806
    %v808 = vpop.permute.xlu0 %807
    %s810 = sor.u32 256, 24
    %811 = vbcast.lane.b32.xlu0 %v797, %s810
    %v812 = vpop.permute.xlu0 %811
    %v813 = vlaneseq
    %v814 = vshrl.u32 %v813, 7
    %v815 = vsub.s32 3, %v814
    %v816 = vrot.slane %v755, %v815
    %818 = vbcast.lane.b32.xlu0 %v816, 256
    %v819 = vpop.permute.xlu0 %818
    %s821 = sor.u32 256, 8
    %822 = vbcast.lane.b32.xlu0 %v816, %s821
    %v823 = vpop.permute.xlu0 %822
    %s825 = sor.u32 256, 16
    %826 = vbcast.lane.b32.xlu0 %v816, %s825
    %v827 = vpop.permute.xlu0 %826
    %s829 = sor.u32 256, 24
    %830 = vbcast.lane.b32.xlu0 %v816, %s829
    %v831 = vpop.permute.xlu0 %830
    %v832 = vlaneseq
    %v833 = vshrl.u32 %v832, 7
    %v834 = vsub.s32 4, %v833
    %v835 = vrot.slane %v755, %v834
    %837 = vbcast.lane.b32.xlu0 %v835, 256
    %v838 = vpop.permute.xlu0 %837
    %s840 = sor.u32 256, 8
    %841 = vbcast.lane.b32.xlu0 %v835, %s840
    %v842 = vpop.permute.xlu0 %841
    %s844 = sor.u32 256, 16
    %845 = vbcast.lane.b32.xlu0 %v835, %s844
    %v846 = vpop.permute.xlu0 %845
    %s848 = sor.u32 256, 24
    %849 = vbcast.lane.b32.xlu0 %v835, %s848
    %v850 = vpop.permute.xlu0 %849
    %v851 = vlaneseq
    %v852 = vshrl.u32 %v851, 7
    %v853 = vsub.s32 5, %v852
    %v854 = vrot.slane %v755, %v853
    %856 = vbcast.lane.b32.xlu0 %v854, 256
    %v857 = vpop.permute.xlu0 %856
    %s859 = sor.u32 256, 8
    %860 = vbcast.lane.b32.xlu0 %v854, %s859
    %v861 = vpop.permute.xlu0 %860
    %s863 = sor.u32 256, 16
    %864 = vbcast.lane.b32.xlu0 %v854, %s863
    %v865 = vpop.permute.xlu0 %864
    %s867 = sor.u32 256, 24
    %868 = vbcast.lane.b32.xlu0 %v854, %s867
    %v869 = vpop.permute.xlu0 %868
    %v870 = vlaneseq
    %v871 = vshrl.u32 %v870, 7
    %v872 = vsub.s32 6, %v871
    %v873 = vrot.slane %v755, %v872
    %875 = vbcast.lane.b32.xlu0 %v873, 256
    %v876 = vpop.permute.xlu0 %875
    %s878 = sor.u32 256, 8
    %879 = vbcast.lane.b32.xlu0 %v873, %s878
    %v880 = vpop.permute.xlu0 %879
    %s882 = sor.u32 256, 16
    %883 = vbcast.lane.b32.xlu0 %v873, %s882
    %v884 = vpop.permute.xlu0 %883
    %s886 = sor.u32 256, 24
    %887 = vbcast.lane.b32.xlu0 %v873, %s886
    %v888 = vpop.permute.xlu0 %887
    %v889 = vlaneseq
    %v890 = vshrl.u32 %v889, 7
    %v891 = vsub.s32 7, %v890
    %v892 = vrot.slane %v755, %v891
    %894 = vbcast.lane.b32.xlu0 %v892, 256
    %v895 = vpop.permute.xlu0 %894
    %s897 = sor.u32 256, 8
    %898 = vbcast.lane.b32.xlu0 %v892, %s897
    %v899 = vpop.permute.xlu0 %898
    %s901 = sor.u32 256, 16
    %902 = vbcast.lane.b32.xlu0 %v892, %s901
    %v903 = vpop.permute.xlu0 %902
    %s905 = sor.u32 256, 24
    %906 = vbcast.lane.b32.xlu0 %v892, %s905
    %v907 = vpop.permute.xlu0 %906
    %v909 = vcombine.high %v755, %v755
    %v911 = vunpack.c.l.s4 1966171168
    %v912 = vunpack.c.0.s8 %v911
    %v913 = vlaneseq
    %v914 = vshrl.u32 %v913, 7
    %v915 = vsub.s32 %v912, %v914
    %v916 = vrot.slane %v755, %v915
    %v918 = vunpack.c.l.s4 1966171168
    %v919 = vunpack.c.0.s8 %v918
    %v920 = vlaneseq
    %v921 = vshrl.u32 %v920, 7
    %v922 = vsub.s32 %v919, %v921
    %v923 = vrot.slane %v909, %v922
    %v924 = vcombine.high %v916, %v916
    %v925 = vcombine.high %v923, %v923
    %v927 = vunpack.c.l.s4 1966171168
    %v928 = vunpack.c.0.s8 %v927
    %v929 = vlaneseq
    %v930 = vshrl.u32 %v929, 7
    %v931 = vsub.s32 %v928, %v930
    %v932 = vrot.slane %v916, %v931
    %v934 = vunpack.c.l.s4 1966171168
    %v935 = vunpack.c.0.s8 %v934
    %v936 = vlaneseq
    %v937 = vshrl.u32 %v936, 7
    %v938 = vsub.s32 %v935, %v937
    %v939 = vrot.slane %v923, %v938
    %v941 = vunpack.c.l.s4 1966171168
    %v942 = vunpack.c.0.s8 %v941
    %v943 = vlaneseq
    %v944 = vshrl.u32 %v943, 7
    %v945 = vsub.s32 %v942, %v944
    %v946 = vrot.slane %v924, %v945
    %v948 = vunpack.c.l.s4 1966171168
    %v949 = vunpack.c.0.s8 %v948
    %v950 = vlaneseq
    %v951 = vshrl.u32 %v950, 7
    %v952 = vsub.s32 %v949, %v951
    %v953 = vrot.slane %v925, %v952
    %v954 = vcombine.high %v932, %v932
    %v955 = vcombine.high %v939, %v939
    %v956 = vcombine.high %v946, %v946
    %v957 = vcombine.high %v953, %v953
    %v958 = vlaneseq
    %v959 = vshrl.u32 %v958, 7
    %v960 = vadd.s32 %v959, 8
    %v961 = vadd.s32 %v959, 16
    %v962 = vadd.s32 %v959, 24
    %v963 = vlaneseq
    %v964 = vshrl.u32 %v963, 7
    %v965 = vsub.s32 0, %v964
    %v966 = vrot.slane %v932, %v965
    %v967 = vlaneseq
    %v968 = vshrl.u32 %v967, 7
    %v969 = vsub.s32 0, %v968
    %v970 = vrot.slane %v946, %v969
    %v971 = vlaneseq
    %v972 = vshrl.u32 %v971, 7
    %v973 = vsub.s32 0, %v972
    %v974 = vrot.slane %v954, %v973
    %v975 = vlaneseq
    %v976 = vshrl.u32 %v975, 7
    %v977 = vsub.s32 0, %v976
    %v978 = vrot.slane %v956, %v977
    %v979 = vlaneseq
    %v980 = vshrl.u32 %v979, 7
    %v981 = vsub.s32 0, %v980
    %v982 = vrot.slane %v939, %v981
    %v983 = vlaneseq
    %v984 = vshrl.u32 %v983, 7
    %v985 = vsub.s32 0, %v984
    %v986 = vrot.slane %v953, %v985
    %v987 = vlaneseq
    %v988 = vshrl.u32 %v987, 7
    %v989 = vsub.s32 0, %v988
    %v990 = vrot.slane %v955, %v989
    %v991 = vlaneseq
    %v992 = vshrl.u32 %v991, 7
    %v993 = vsub.s32 0, %v992
    %v994 = vrot.slane %v957, %v993
    %vm1003 = vcmp.gt.f32.partialorder %v762, %v966
    %vm1004 = vcmp.gt.f32.partialorder %v766, %v966
    %vm1005 = vcmp.gt.f32.partialorder %v770, %v966
    %vm1006 = vcmp.gt.f32.partialorder %v774, %v966
    %vm1007 = vcmp.gt.f32.partialorder %v781, %v970
    %vm1008 = vcmp.gt.f32.partialorder %v785, %v970
    %vm1009 = vcmp.gt.f32.partialorder %v789, %v970
    %vm1010 = vcmp.gt.f32.partialorder %v793, %v970
    %vm1011 = vcmp.gt.f32.partialorder %v800, %v974
    %vm1012 = vcmp.gt.f32.partialorder %v804, %v974
    %vm1013 = vcmp.gt.f32.partialorder %v808, %v974
    %vm1014 = vcmp.gt.f32.partialorder %v812, %v974
    %vm1015 = vcmp.gt.f32.partialorder %v819, %v978
    %vm1016 = vcmp.gt.f32.partialorder %v823, %v978
    %vm1017 = vcmp.gt.f32.partialorder %v827, %v978
    %vm1018 = vcmp.gt.f32.partialorder %v831, %v978
    %vm1019 = vcmp.gt.f32.partialorder %v838, %v982
    %vm1020 = vcmp.gt.f32.partialorder %v842, %v982
    %vm1021 = vcmp.gt.f32.partialorder %v846, %v982
    %vm1022 = vcmp.gt.f32.partialorder %v850, %v982
    %vm1023 = vcmp.gt.f32.partialorder %v857, %v986
    %vm1024 = vcmp.gt.f32.partialorder %v861, %v986
    %vm1025 = vcmp.gt.f32.partialorder %v865, %v986
    %vm1026 = vcmp.gt.f32.partialorder %v869, %v986
    %vm1027 = vcmp.gt.f32.partialorder %v876, %v990
    %vm1028 = vcmp.gt.f32.partialorder %v880, %v990
    %vm1029 = vcmp.gt.f32.partialorder %v884, %v990
    %vm1030 = vcmp.gt.f32.partialorder %v888, %v990
    %vm1031 = vcmp.gt.f32.partialorder %v895, %v994
    %vm1032 = vcmp.gt.f32.partialorder %v899, %v994
    %vm1033 = vcmp.gt.f32.partialorder %v903, %v994
    %vm1034 = vcmp.gt.f32.partialorder %v907, %v994
    %vm1035 = vcmp.eq.f32.partialorder %v762, %v966
    %vm1036 = vcmp.eq.f32.partialorder %v766, %v966
    %vm1037 = vcmp.eq.f32.partialorder %v770, %v966
    %vm1038 = vcmp.eq.f32.partialorder %v774, %v966
    %vm1039 = vcmp.eq.f32.partialorder %v781, %v970
    %vm1040 = vcmp.eq.f32.partialorder %v785, %v970
    %vm1041 = vcmp.eq.f32.partialorder %v789, %v970
    %vm1042 = vcmp.eq.f32.partialorder %v793, %v970
    %vm1043 = vcmp.eq.f32.partialorder %v800, %v974
    %vm1044 = vcmp.eq.f32.partialorder %v804, %v974
    %vm1045 = vcmp.eq.f32.partialorder %v808, %v974
    %vm1046 = vcmp.eq.f32.partialorder %v812, %v974
    %vm1047 = vcmp.eq.f32.partialorder %v819, %v978
    %vm1048 = vcmp.eq.f32.partialorder %v823, %v978
    %vm1049 = vcmp.eq.f32.partialorder %v827, %v978
    %vm1050 = vcmp.eq.f32.partialorder %v831, %v978
    %vm1051 = vcmp.eq.f32.partialorder %v838, %v982
    %vm1052 = vcmp.eq.f32.partialorder %v842, %v982
    %vm1053 = vcmp.eq.f32.partialorder %v846, %v982
    %vm1054 = vcmp.eq.f32.partialorder %v850, %v982
    %vm1055 = vcmp.eq.f32.partialorder %v857, %v986
    %vm1056 = vcmp.eq.f32.partialorder %v861, %v986
    %vm1057 = vcmp.eq.f32.partialorder %v865, %v986
    %vm1058 = vcmp.eq.f32.partialorder %v869, %v986
    %vm1059 = vcmp.eq.f32.partialorder %v876, %v990
    %vm1060 = vcmp.eq.f32.partialorder %v880, %v990
    %vm1061 = vcmp.eq.f32.partialorder %v884, %v990
    %vm1062 = vcmp.eq.f32.partialorder %v888, %v990
    %vm1063 = vcmp.eq.f32.partialorder %v895, %v994
    %vm1064 = vcmp.eq.f32.partialorder %v899, %v994
    %vm1065 = vcmp.eq.f32.partialorder %v903, %v994
    %vm1066 = vcmp.eq.f32.partialorder %v907, %v994
    %vm1067 = vcmp.lt.s32.totalorder %v959, %v715
    %vm1068 = vcmp.lt.s32.totalorder %v960, %v715
    %vm1069 = vcmp.lt.s32.totalorder %v961, %v715
    %vm1070 = vcmp.lt.s32.totalorder %v962, %v715
    %vm1071 = vmand %vm1035, %vm1067
    %vm1072 = vmand %vm1036, %vm1068
    %vm1073 = vmand %vm1037, %vm1069
    %vm1074 = vmand %vm1038, %vm1070
    %vm1075 = vmand %vm1039, %vm1067
    %vm1076 = vmand %vm1040, %vm1068
    %vm1077 = vmand %vm1041, %vm1069
    %vm1078 = vmand %vm1042, %vm1070
    %vm1079 = vmand %vm1043, %vm1067
    %vm1080 = vmand %vm1044, %vm1068
    %vm1081 = vmand %vm1045, %vm1069
    %vm1082 = vmand %vm1046, %vm1070
    %vm1083 = vmand %vm1047, %vm1067
    %vm1084 = vmand %vm1048, %vm1068
    %vm1085 = vmand %vm1049, %vm1069
    %vm1086 = vmand %vm1050, %vm1070
    %vm1087 = vmand %vm1051, %vm1067
    %vm1088 = vmand %vm1052, %vm1068
    %vm1089 = vmand %vm1053, %vm1069
    %vm1090 = vmand %vm1054, %vm1070
    %vm1091 = vmand %vm1055, %vm1067
    %vm1092 = vmand %vm1056, %vm1068
    %vm1093 = vmand %vm1057, %vm1069
    %vm1094 = vmand %vm1058, %vm1070
    %vm1095 = vmand %vm1059, %vm1067
    %vm1096 = vmand %vm1060, %vm1068
    %vm1097 = vmand %vm1061, %vm1069
    %vm1098 = vmand %vm1062, %vm1070
    %vm1099 = vmand %vm1063, %vm1067
    %vm1100 = vmand %vm1064, %vm1068
    %vm1101 = vmand %vm1065, %vm1069
    %vm1102 = vmand %vm1066, %vm1070
    %vm1103 = vmor %vm1003, %vm1071
    %vm1104 = vmor %vm1004, %vm1072
    %vm1105 = vmor %vm1005, %vm1073
    %vm1106 = vmor %vm1006, %vm1074
    %vm1107 = vmor %vm1007, %vm1075
    %vm1108 = vmor %vm1008, %vm1076
    %vm1109 = vmor %vm1009, %vm1077
    %vm1110 = vmor %vm1010, %vm1078
    %vm1111 = vmor %vm1011, %vm1079
    %vm1112 = vmor %vm1012, %vm1080
    %vm1113 = vmor %vm1013, %vm1081
    %vm1114 = vmor %vm1014, %vm1082
    %vm1115 = vmor %vm1015, %vm1083
    %vm1116 = vmor %vm1016, %vm1084
    %vm1117 = vmor %vm1017, %vm1085
    %vm1118 = vmor %vm1018, %vm1086
    %vm1119 = vmor %vm1019, %vm1087
    %vm1120 = vmor %vm1020, %vm1088
    %vm1121 = vmor %vm1021, %vm1089
    %vm1122 = vmor %vm1022, %vm1090
    %vm1123 = vmor %vm1023, %vm1091
    %vm1124 = vmor %vm1024, %vm1092
    %vm1125 = vmor %vm1025, %vm1093
    %vm1126 = vmor %vm1026, %vm1094
    %vm1127 = vmor %vm1027, %vm1095
    %vm1128 = vmor %vm1028, %vm1096
    %vm1129 = vmor %vm1029, %vm1097
    %vm1130 = vmor %vm1030, %vm1098
    %vm1131 = vmor %vm1031, %vm1099
    %vm1132 = vmor %vm1032, %vm1100
    %vm1133 = vmor %vm1033, %vm1101
    %vm1134 = vmor %vm1034, %vm1102
    %v1135 = vsel %vm1103, 1.0, 0.0
    %v1136 = vsel %vm1104, 1.0, 0.0
    %v1137 = vsel %vm1105, 1.0, 0.0
    %v1138 = vsel %vm1106, 1.0, 0.0
    %v1139 = vsel %vm1107, 1.0, 0.0
    %v1140 = vsel %vm1108, 1.0, 0.0
    %v1141 = vsel %vm1109, 1.0, 0.0
    %v1142 = vsel %vm1110, 1.0, 0.0
    %v1143 = vsel %vm1111, 1.0, 0.0
    %v1144 = vsel %vm1112, 1.0, 0.0
    %v1145 = vsel %vm1113, 1.0, 0.0
    %v1146 = vsel %vm1114, 1.0, 0.0
    %v1147 = vsel %vm1115, 1.0, 0.0
    %v1148 = vsel %vm1116, 1.0, 0.0
    %v1149 = vsel %vm1117, 1.0, 0.0
    %v1150 = vsel %vm1118, 1.0, 0.0
    %v1151 = vsel %vm1119, 1.0, 0.0
    %v1152 = vsel %vm1120, 1.0, 0.0
    %v1153 = vsel %vm1121, 1.0, 0.0
    %v1154 = vsel %vm1122, 1.0, 0.0
    %v1155 = vsel %vm1123, 1.0, 0.0
    %v1156 = vsel %vm1124, 1.0, 0.0
    %v1157 = vsel %vm1125, 1.0, 0.0
    %v1158 = vsel %vm1126, 1.0, 0.0
    %v1159 = vsel %vm1127, 1.0, 0.0
    %v1160 = vsel %vm1128, 1.0, 0.0
    %v1161 = vsel %vm1129, 1.0, 0.0
    %v1162 = vsel %vm1130, 1.0, 0.0
    %v1163 = vsel %vm1131, 1.0, 0.0
    %v1164 = vsel %vm1132, 1.0, 0.0
    %v1165 = vsel %vm1133, 1.0, 0.0
    %v1166 = vsel %vm1134, 1.0, 0.0
    %v1167 = vsel %vm168, %v1135, 0.0
    %v1168 = vsel %vm168, %v1136, 0.0
    %v1169 = vadd.f32 %v1167, %v1168
    %v1170 = vsel %vm168, %v1137, 0.0
    %v1171 = vadd.f32 %v1169, %v1170
    %v1172 = vsel %vm168, %v1138, 0.0
    %v1173 = vadd.f32 %v1171, %v1172
    %v1174 = vrot.slane %v1173, 4
    %v1175 = vadd.f32 %v1173, %v1174
    %v1176 = vrot.slane %v1175, 2
    %v1177 = vadd.f32 %v1175, %v1176
    %v1178 = vrot.slane %v1177, 1
    %v1179 = vadd.f32 %v1177, %v1178
    %v1180 = vsel %vm168, %v1139, 0.0
    %v1181 = vsel %vm168, %v1140, 0.0
    %v1182 = vadd.f32 %v1180, %v1181
    %v1183 = vsel %vm168, %v1141, 0.0
    %v1184 = vadd.f32 %v1182, %v1183
    %v1185 = vsel %vm168, %v1142, 0.0
    %v1186 = vadd.f32 %v1184, %v1185
    %v1187 = vrot.slane %v1186, 4
    %v1188 = vadd.f32 %v1186, %v1187
    %v1189 = vrot.slane %v1188, 2
    %v1190 = vadd.f32 %v1188, %v1189
    %v1191 = vrot.slane %v1190, 1
    %v1192 = vadd.f32 %v1190, %v1191
    %v1193 = vsel %vm168, %v1143, 0.0
    %v1194 = vsel %vm168, %v1144, 0.0
    %v1195 = vadd.f32 %v1193, %v1194
    %v1196 = vsel %vm168, %v1145, 0.0
    %v1197 = vadd.f32 %v1195, %v1196
    %v1198 = vsel %vm168, %v1146, 0.0
    %v1199 = vadd.f32 %v1197, %v1198
    %v1200 = vrot.slane %v1199, 4
    %v1201 = vadd.f32 %v1199, %v1200
    %v1202 = vrot.slane %v1201, 2
    %v1203 = vadd.f32 %v1201, %v1202
    %v1204 = vrot.slane %v1203, 1
    %v1205 = vadd.f32 %v1203, %v1204
    %v1206 = vsel %vm168, %v1147, 0.0
    %v1207 = vsel %vm168, %v1148, 0.0
    %v1208 = vadd.f32 %v1206, %v1207
    %v1209 = vsel %vm168, %v1149, 0.0
    %v1210 = vadd.f32 %v1208, %v1209
    %v1211 = vsel %vm168, %v1150, 0.0
    %v1212 = vadd.f32 %v1210, %v1211
    %v1213 = vrot.slane %v1212, 4
    %v1214 = vadd.f32 %v1212, %v1213
    %v1215 = vrot.slane %v1214, 2
    %v1216 = vadd.f32 %v1214, %v1215
    %v1217 = vrot.slane %v1216, 1
    %v1218 = vadd.f32 %v1216, %v1217
    %v1219 = vsel %vm168, %v1151, 0.0
    %v1220 = vsel %vm168, %v1152, 0.0
    %v1221 = vadd.f32 %v1219, %v1220
    %v1222 = vsel %vm168, %v1153, 0.0
    %v1223 = vadd.f32 %v1221, %v1222
    %v1224 = vsel %vm168, %v1154, 0.0
    %v1225 = vadd.f32 %v1223, %v1224
    %v1226 = vrot.slane %v1225, 4
    %v1227 = vadd.f32 %v1225, %v1226
    %v1228 = vrot.slane %v1227, 2
    %v1229 = vadd.f32 %v1227, %v1228
    %v1230 = vrot.slane %v1229, 1
    %v1231 = vadd.f32 %v1229, %v1230
    %v1232 = vsel %vm168, %v1155, 0.0
    %v1233 = vsel %vm168, %v1156, 0.0
    %v1234 = vadd.f32 %v1232, %v1233
    %v1235 = vsel %vm168, %v1157, 0.0
    %v1236 = vadd.f32 %v1234, %v1235
    %v1237 = vsel %vm168, %v1158, 0.0
    %v1238 = vadd.f32 %v1236, %v1237
    %v1239 = vrot.slane %v1238, 4
    %v1240 = vadd.f32 %v1238, %v1239
    %v1241 = vrot.slane %v1240, 2
    %v1242 = vadd.f32 %v1240, %v1241
    %v1243 = vrot.slane %v1242, 1
    %v1244 = vadd.f32 %v1242, %v1243
    %v1245 = vsel %vm168, %v1159, 0.0
    %v1246 = vsel %vm168, %v1160, 0.0
    %v1247 = vadd.f32 %v1245, %v1246
    %v1248 = vsel %vm168, %v1161, 0.0
    %v1249 = vadd.f32 %v1247, %v1248
    %v1250 = vsel %vm168, %v1162, 0.0
    %v1251 = vadd.f32 %v1249, %v1250
    %v1252 = vrot.slane %v1251, 4
    %v1253 = vadd.f32 %v1251, %v1252
    %v1254 = vrot.slane %v1253, 2
    %v1255 = vadd.f32 %v1253, %v1254
    %v1256 = vrot.slane %v1255, 1
    %v1257 = vadd.f32 %v1255, %v1256
    %v1258 = vsel %vm168, %v1163, 0.0
    %v1259 = vsel %vm168, %v1164, 0.0
    %v1260 = vadd.f32 %v1258, %v1259
    %v1261 = vsel %vm168, %v1165, 0.0
    %v1262 = vadd.f32 %v1260, %v1261
    %v1263 = vsel %vm168, %v1166, 0.0
    %v1264 = vadd.f32 %v1262, %v1263
    %v1265 = vrot.slane %v1264, 4
    %v1266 = vadd.f32 %v1264, %v1265
    %v1267 = vrot.slane %v1266, 2
    %v1268 = vadd.f32 %v1266, %v1267
    %v1269 = vrot.slane %v1268, 1
    %v1270 = vadd.f32 %v1268, %v1269
    %vm1271 = vcmp.lt.f32.partialorder %v1179, 8.0
    %vm1272 = vcmp.lt.f32.partialorder %v1192, 8.0
    %vm1273 = vcmp.lt.f32.partialorder %v1205, 8.0
    %vm1274 = vcmp.lt.f32.partialorder %v1218, 8.0
    %vm1275 = vcmp.lt.f32.partialorder %v1231, 8.0
    %vm1276 = vcmp.lt.f32.partialorder %v1244, 8.0
    %vm1277 = vcmp.lt.f32.partialorder %v1257, 8.0
    %vm1278 = vcmp.lt.f32.partialorder %v1270, 8.0
    %v1279 = vrot.slane %v755, 1
    %v1280 = vrot.slane %v755, 2
    %v1281 = vrot.slane %v755, 3
    %v1282 = vrot.slane %v755, 4
    %v1283 = vrot.slane %v755, 5
    %v1284 = vrot.slane %v755, 6
    %v1285 = vrot.slane %v755, 7
    %v1294 = vsel %vm1271, %v755, -inf
    %v1295 = vsel %vm1272, %v1279, -inf
    %v1296 = vsel %vm1273, %v1280, -inf
    %v1297 = vsel %vm1274, %v1281, -inf
    %v1298 = vsel %vm1275, %v1282, -inf
    %v1299 = vsel %vm1276, %v1283, -inf
    %v1300 = vsel %vm1277, %v1284, -inf
    %v1301 = vsel %vm1278, %v1285, -inf
    %v1310 = vrot.slane %v1295, 7
    %v1311 = vsel %vm741, %v1310, %v1294
    %v1312 = vrot.slane %v1296, 6
    %v1313 = vsel %vm742, %v1312, %v1311
    %v1314 = vrot.slane %v1297, 5
    %v1315 = vsel %vm744, %v1314, %v1313
    %v1316 = vrot.slane %v1298, 4
    %v1317 = vsel %vm746, %v1316, %v1315
    %v1318 = vrot.slane %v1299, 3
    %v1319 = vsel %vm748, %v1318, %v1317
    %v1320 = vrot.slane %v1300, 2
    %v1321 = vsel %vm750, %v1320, %v1319
    %v1322 = vrot.slane %v1301, 1
    %v1323 = vsel %vm752, %v1322, %v1321
    %v1325 = vsel %vm168, %v1323, -inf
    %1326 = vmax.xlane.f32.xlu0 %v1325
    %v1327 = vpop.xlane.xlu0 %1326
    %v1329 = vrot.slane %v1327, 1
    %v1330 = vrot.slane %v1327, 2
    %v1331 = vrot.slane %v1327, 3
    %v1332 = vrot.slane %v1327, 4
    %v1333 = vrot.slane %v1327, 5
    %v1334 = vrot.slane %v1327, 6
    %v1335 = vrot.slane %v1327, 7
    %v1344 = vsub.f32 %v1294, %v1327
    %v1345 = vsub.f32 %v1295, %v1329
    %v1346 = vsub.f32 %v1296, %v1330
    %v1347 = vsub.f32 %v1297, %v1331
    %v1348 = vsub.f32 %v1298, %v1332
    %v1349 = vsub.f32 %v1299, %v1333
    %v1350 = vsub.f32 %v1300, %v1334
    %v1351 = vsub.f32 %v1301, %v1335
    %v1352 = vmul.f32 %v1344, 1.442695
    %v1353 = vpow.pop %v1352
    %v1354 = vmul.f32 %v1345, 1.442695
    %v1355 = vpow.pop %v1354
    %v1356 = vmul.f32 %v1346, 1.442695
    %v1357 = vpow.pop %v1356
    %v1358 = vmul.f32 %v1347, 1.442695
    %v1359 = vpow.pop %v1358
    %v1360 = vmul.f32 %v1348, 1.442695
    %v1361 = vpow.pop %v1360
    %v1362 = vmul.f32 %v1349, 1.442695
    %v1363 = vpow.pop %v1362
    %v1364 = vmul.f32 %v1350, 1.442695
    %v1365 = vpow.pop %v1364
    %v1366 = vmul.f32 %v1351, 1.442695
    %v1367 = vpow.pop %v1366
    %v1376 = vrot.slane %v1355, 7
    %v1377 = vsel %vm741, %v1376, %v1353
    %v1378 = vrot.slane %v1357, 6
    %v1379 = vsel %vm742, %v1378, %v1377
    %v1380 = vrot.slane %v1359, 5
    %v1381 = vsel %vm744, %v1380, %v1379
    %v1382 = vrot.slane %v1361, 4
    %v1383 = vsel %vm746, %v1382, %v1381
    %v1384 = vrot.slane %v1363, 3
    %v1385 = vsel %vm748, %v1384, %v1383
    %v1386 = vrot.slane %v1365, 2
    %v1387 = vsel %vm750, %v1386, %v1385
    %v1388 = vrot.slane %v1367, 1
    %v1389 = vsel %vm752, %v1388, %v1387
    %v1391 = vsel %vm168, %v1389, 0.0
    %1392 = vadd.xlane.f32.xlu0 %v1391
    %v1393 = vpop.xlane.xlu0 %1392
    %v1395 = vrot.slane %v1393, 1
    %v1396 = vrot.slane %v1393, 2
    %v1397 = vrot.slane %v1393, 3
    %v1398 = vrot.slane %v1393, 4
    %v1399 = vrot.slane %v1393, 5
    %v1400 = vrot.slane %v1393, 6
    %v1401 = vrot.slane %v1393, 7
    %v1410 = vrcp.pop %v1393
    %v1411 = vmul.f32 %v1353, %v1410
    %v1412 = vrcp.pop %v1395
    %v1413 = vmul.f32 %v1355, %v1412
    %v1414 = vrcp.pop %v1396
    %v1415 = vmul.f32 %v1357, %v1414
    %v1416 = vrcp.pop %v1397
    %v1417 = vmul.f32 %v1359, %v1416
    %v1418 = vrcp.pop %v1398
    %v1419 = vmul.f32 %v1361, %v1418
    %v1420 = vrcp.pop %v1399
    %v1421 = vmul.f32 %v1363, %v1420
    %v1422 = vrcp.pop %v1400
    %v1423 = vmul.f32 %v1365, %v1422
    %v1424 = vrcp.pop %v1401
    %v1425 = vmul.f32 %v1367, %v1424
    %v1426 = vld [vmem:[%s2] sm:$0x1]
    %v1428 = vlaneseq
    %v1429 = vshrl.u32 %v1428, 7
    %v1430 = vsub.s32 0, %v1429
    %v1431 = vrot.slane %v1426, %v1430
    %v1433 = vmul.f32 %v1411, %v1431
    %v1434 = vmul.f32 %v1413, %v1431
    %v1435 = vmul.f32 %v1415, %v1431
    %v1436 = vmul.f32 %v1417, %v1431
    %v1437 = vmul.f32 %v1419, %v1431
    %v1438 = vmul.f32 %v1421, %v1431
    %v1439 = vmul.f32 %v1423, %v1431
    %v1440 = vmul.f32 %v1425, %v1431
    %v1449 = vrot.slane %v1434, 7
    %v1450 = vsel %vm741, %v1449, %v1433
    %v1451 = vrot.slane %v1435, 6
    %v1452 = vsel %vm742, %v1451, %v1450
    %v1453 = vrot.slane %v1436, 5
    %v1454 = vsel %vm744, %v1453, %v1452
    %v1455 = vrot.slane %v1437, 4
    %v1456 = vsel %vm746, %v1455, %v1454
    %v1457 = vrot.slane %v1438, 3
    %v1458 = vsel %vm748, %v1457, %v1456
    %v1459 = vrot.slane %v1439, 2
    %v1460 = vsel %vm750, %v1459, %v1458
    %v1461 = vrot.slane %v1440, 1
    %v1462 = vsel %vm752, %v1461, %v1460
    %v1464 = vsel %vm168, %v1462, 0.0
    %1465 = vadd.xlane.f32.xlu0 %v1464
    %v1466 = vpop.xlane.xlu0 %1465
    %v1467 = vld [vmem:[#allocation3 + $0x1a0] sm:$0x1]
    %v1468 = vlaneseq
    %v1469 = vshrl.u32 %v1468, 7
    %v1470 = vsub.s32 0, %v1469
    %v1471 = vrot.slane %v1467, %v1470
    %v1472 = vmul.f32 %v1466, %v1471
    %v1473 = vld [vmem:[#allocation3 + $0x1a8] sm:$0x1]
    %v1474 = vlaneseq
    %v1475 = vshrl.u32 %v1474, 7
    %v1476 = vsub.s32 0, %v1475
    %v1477 = vrot.slane %v1473, %v1476
    %v1478 = vadd.f32 %v1472, %v1477
    %v1479 = vld [vmem:[#allocation3 + $0x90] sm:$0xff]
    %v1480 = vld [vmem:[#allocation3 + $0x98] sm:$0xff]
    %v1481 = vld [vmem:[#allocation3 + $0xa0] sm:$0xff]
    %v1482 = vld [vmem:[#allocation3 + $0xa8] sm:$0xff]
    %1483 = vmatprep.subr.mxu0 0.0
    %1484 = vmatpush1.msra.mxu0 %v1479
    %1485 = vmatprep.subr.mxu0 0.0
    %1486 = vmatpush1.msra.mxu0 %v1480
    %1487 = vmatprep.subr.mxu0 0.0
    %1488 = vmatpush1.msra.mxu0 %v1481
    %1489 = vmatprep.subr.mxu0 0.0
    %1490 = vmatpush1.msra.mxu0 %v1482
    %1491 = vmatprep.subr.mxu0 0.0
    %1492 = vmatpush1.msra.mxu0 0.0
    %1493 = vmatprep.subr.mxu0 0.0
    %1494 = vmatpush1.msra.mxu0 0.0
    %1495 = vmatprep.subr.mxu0 0.0
    %1496 = vmatpush1.msra.mxu0 0.0
    %1497 = vmatprep.subr.mxu0 0.0
    %1498 = vmatpush1.msra.mxu0 0.0
    %1499 = vmatprep.subr.mxu0 0.0
    %1500 = vmatpush1.msra.mxu0 0.0
    %1501 = vmatprep.subr.mxu0 0.0
    %1502 = vmatpush1.msra.mxu0 0.0
    %1503 = vmatprep.subr.mxu0 0.0
    %1504 = vmatpush1.msra.mxu0 0.0
    %1505 = vmatprep.subr.mxu0 0.0
    %1506 = vmatpush1.msra.mxu0 0.0
    %1507 = vmatprep.subr.mxu0 0.0
    %1508 = vmatpush1.msra.mxu0 0.0
    %1509 = vmatprep.subr.mxu0 0.0
    %1510 = vmatpush1.msra.mxu0 0.0
    %1511 = vmatprep.subr.mxu0 0.0
    %1512 = vmatpush1.msra.mxu0 0.0
    %1513 = vmatprep.subr.mxu0 0.0
    %1514 = vmatpush1.msra.mxu0 0.0
    %1515 = vmatprep.subr.mxu0 0.0
    %1516 = vmatpush1.msra.mxu0 0.0
    %1517 = vmatprep.subr.mxu0 0.0
    %1518 = vmatpush1.msra.mxu0 0.0
    %1519 = vmatprep.subr.mxu0 0.0
    %1520 = vmatpush1.msra.mxu0 0.0
    %1521 = vmatprep.subr.mxu0 0.0
    %1522 = vmatpush1.msra.mxu0 0.0
    %1523 = vmatprep.subr.mxu0 0.0
    %1524 = vmatpush1.msra.mxu0 0.0
    %1525 = vmatprep.subr.mxu0 0.0
    %1526 = vmatpush1.msra.mxu0 0.0
    %1527 = vmatprep.subr.mxu0 0.0
    %1528 = vmatpush1.msra.mxu0 0.0
    %1529 = vmatprep.subr.mxu0 0.0
    %1530 = vmatpush1.msra.mxu0 0.0
    %1531 = vmatprep.subr.mxu0 0.0
    %1532 = vmatpush1.msra.mxu0 0.0
    %1533 = vmatprep.subr.mxu0 0.0
    %1534 = vmatpush1.msra.mxu0 0.0
    %1535 = vmatprep.subr.mxu0 0.0
    %1536 = vmatpush1.msra.mxu0 0.0
    %1537 = vmatprep.subr.mxu0 0.0
    %1538 = vmatpush1.msra.mxu0 0.0
    %1539 = vmatprep.subr.mxu0 0.0
    %1540 = vmatpush1.msra.mxu0 0.0
    %1541 = vmatprep.subr.mxu0 0.0
    %1542 = vmatpush1.msra.mxu0 0.0
    %1543 = vmatprep.subr.mxu0 0.0
    %1544 = vmatpush1.msra.mxu0 0.0
    %1545 = vmatprep.subr.mxu0 0.0
    %1546 = vmatpush1.msra.mxu0 0.0
    %1547 = vmatprep.mubr.f32.mxu0 0.0
    %1548 = vmatmul.mubr.f32.gmra.mrb[0].mxu0 %v609
    %v1549 = vpop.f32.mrb[0].mxu0
    %v1550 = vadd.f32 0.0, %v1549
    %v1551 = vpop.f32.mrb[0].mxu0
    %1552 = vmatprep.mubr.f32.mxu0 0.0
    %1553 = vmatmul.mubr.f32.gmra.mrb[0].mxu0 %v612
    %v1554 = vpop.f32.mrb[0].mxu0
    %v1555 = vadd.f32 0.0, %v1554
    %v1556 = vpop.f32.mrb[0].mxu0
    %1557 = vmatprep.mubr.f32.mxu0 0.0
    %1558 = vmatmul.mubr.f32.gmra.mrb[0].mxu0 %v615
    %v1559 = vpop.f32.mrb[0].mxu0
    %v1560 = vadd.f32 0.0, %v1559
    %v1561 = vpop.f32.mrb[0].mxu0
    %1562 = vmatprep.mubr.f32.mxu0 0.0
    %1563 = vmatmul.mubr.f32.gmra.mrb[0].mxu0 %v618
    %v1564 = vpop.f32.mrb[0].mxu0
    %v1565 = vadd.f32 0.0, %v1564
    %v1566 = vpop.f32.mrb[0].mxu0
    %1567 = vmatprep.mubr.f32.mxu0 0.0
    %1568 = vmatmul.mubr.f32.gmra.mrb[0].mxu0 %v621
    %v1569 = vpop.f32.mrb[0].mxu0
    %v1570 = vadd.f32 0.0, %v1569
    %v1571 = vpop.f32.mrb[0].mxu0
    %1572 = vdwg.mxu0
    %v1573 = vld [vmem:[#allocation3 + $0x1b0] sm:$0x1]
    %v1574 = vlaneseq
    %v1575 = vshrl.u32 %v1574, 7
    %v1576 = vsub.s32 0, %v1575
    %v1577 = vrot.slane %v1573, %v1576
    %v1578 = vadd.f32 %v1550, %v1577
    %v1580 = vcombine.high %v1578, %v1578
    %v1582 = vunpack.c.l.s4 1966171168
    %v1583 = vunpack.c.0.s8 %v1582
    %v1584 = vlaneseq
    %v1585 = vshrl.u32 %v1584, 7
    %v1586 = vsub.s32 %v1583, %v1585
    %v1587 = vrot.slane %v1578, %v1586
    %v1589 = vunpack.c.l.s4 1966171168
    %v1590 = vunpack.c.0.s8 %v1589
    %v1591 = vlaneseq
    %v1592 = vshrl.u32 %v1591, 7
    %v1593 = vsub.s32 %v1590, %v1592
    %v1594 = vrot.slane %v1580, %v1593
    %v1595 = vcombine.high %v1587, %v1587
    %v1596 = vcombine.high %v1594, %v1594
    %v1598 = vunpack.c.l.s4 1966171168
    %v1599 = vunpack.c.0.s8 %v1598
    %v1600 = vlaneseq
    %v1601 = vshrl.u32 %v1600, 7
    %v1602 = vsub.s32 %v1599, %v1601
    %v1603 = vrot.slane %v1587, %v1602
    %v1605 = vunpack.c.l.s4 1966171168
    %v1606 = vunpack.c.0.s8 %v1605
    %v1607 = vlaneseq
    %v1608 = vshrl.u32 %v1607, 7
    %v1609 = vsub.s32 %v1606, %v1608
    %v1610 = vrot.slane %v1594, %v1609
    %v1612 = vunpack.c.l.s4 1966171168
    %v1613 = vunpack.c.0.s8 %v1612
    %v1614 = vlaneseq
    %v1615 = vshrl.u32 %v1614, 7
    %v1616 = vsub.s32 %v1613, %v1615
    %v1617 = vrot.slane %v1595, %v1616
    %v1619 = vunpack.c.l.s4 1966171168
    %v1620 = vunpack.c.0.s8 %v1619
    %v1621 = vlaneseq
    %v1622 = vshrl.u32 %v1621, 7
    %v1623 = vsub.s32 %v1620, %v1622
    %v1624 = vrot.slane %v1596, %v1623
    %v1625 = vcombine.high %v1603, %v1603
    %v1626 = vcombine.high %v1610, %v1610
    %v1627 = vcombine.high %v1617, %v1617
    %v1628 = vcombine.high %v1624, %v1624
    %v1629 = vlaneseq
    %v1630 = vshrl.u32 %v1629, 7
    %v1631 = vsub.s32 0, %v1630
    %v1632 = vrot.slane %v1603, %v1631
    %v1633 = vlaneseq
    %v1634 = vshrl.u32 %v1633, 7
    %v1635 = vsub.s32 0, %v1634
    %v1636 = vrot.slane %v1617, %v1635
    %v1637 = vlaneseq
    %v1638 = vshrl.u32 %v1637, 7
    %v1639 = vsub.s32 0, %v1638
    %v1640 = vrot.slane %v1625, %v1639
    %v1641 = vlaneseq
    %v1642 = vshrl.u32 %v1641, 7
    %v1643 = vsub.s32 0, %v1642
    %v1644 = vrot.slane %v1627, %v1643
    %v1645 = vlaneseq
    %v1646 = vshrl.u32 %v1645, 7
    %v1647 = vsub.s32 0, %v1646
    %v1648 = vrot.slane %v1610, %v1647
    %v1649 = vlaneseq
    %v1650 = vshrl.u32 %v1649, 7
    %v1651 = vsub.s32 0, %v1650
    %v1652 = vrot.slane %v1624, %v1651
    %v1653 = vlaneseq
    %v1654 = vshrl.u32 %v1653, 7
    %v1655 = vsub.s32 0, %v1654
    %v1656 = vrot.slane %v1626, %v1655
    %v1657 = vlaneseq
    %v1658 = vshrl.u32 %v1657, 7
    %v1659 = vsub.s32 0, %v1658
    %v1660 = vrot.slane %v1628, %v1659
    %v1669 = vsub.f32 %v1632, %v1555
    %v1670 = vsub.f32 %v1632, %v1560
    %v1671 = vsub.f32 %v1632, %v1565
    %v1672 = vsub.f32 %v1632, %v1570
    %v1673 = vsub.f32 %v1636, %v1555
    %v1674 = vsub.f32 %v1636, %v1560
    %v1675 = vsub.f32 %v1636, %v1565
    %v1676 = vsub.f32 %v1636, %v1570
    %v1677 = vsub.f32 %v1640, %v1555
    %v1678 = vsub.f32 %v1640, %v1560
    %v1679 = vsub.f32 %v1640, %v1565
    %v1680 = vsub.f32 %v1640, %v1570
    %v1681 = vsub.f32 %v1644, %v1555
    %v1682 = vsub.f32 %v1644, %v1560
    %v1683 = vsub.f32 %v1644, %v1565
    %v1684 = vsub.f32 %v1644, %v1570
    %v1685 = vsub.f32 %v1648, %v1555
    %v1686 = vsub.f32 %v1648, %v1560
    %v1687 = vsub.f32 %v1648, %v1565
    %v1688 = vsub.f32 %v1648, %v1570
    %v1689 = vsub.f32 %v1652, %v1555
    %v1690 = vsub.f32 %v1652, %v1560
    %v1691 = vsub.f32 %v1652, %v1565
    %v1692 = vsub.f32 %v1652, %v1570
    %v1693 = vsub.f32 %v1656, %v1555
    %v1694 = vsub.f32 %v1656, %v1560
    %v1695 = vsub.f32 %v1656, %v1565
    %v1696 = vsub.f32 %v1656, %v1570
    %v1697 = vsub.f32 %v1660, %v1555
    %v1698 = vsub.f32 %v1660, %v1560
    %v1699 = vsub.f32 %v1660, %v1565
    %v1700 = vsub.f32 %v1660, %v1570
    %v1701 = vmax.f32 %v1669, 0.0
    %v1702 = vmax.f32 %v1670, 0.0
    %v1703 = vmax.f32 %v1671, 0.0
    %v1704 = vmax.f32 %v1672, 0.0
    %v1705 = vmax.f32 %v1673, 0.0
    %v1706 = vmax.f32 %v1674, 0.0
    %v1707 = vmax.f32 %v1675, 0.0
    %v1708 = vmax.f32 %v1676, 0.0
    %v1709 = vmax.f32 %v1677, 0.0
    %v1710 = vmax.f32 %v1678, 0.0
    %v1711 = vmax.f32 %v1679, 0.0
    %v1712 = vmax.f32 %v1680, 0.0
    %v1713 = vmax.f32 %v1681, 0.0
    %v1714 = vmax.f32 %v1682, 0.0
    %v1715 = vmax.f32 %v1683, 0.0
    %v1716 = vmax.f32 %v1684, 0.0
    %v1717 = vmax.f32 %v1685, 0.0
    %v1718 = vmax.f32 %v1686, 0.0
    %v1719 = vmax.f32 %v1687, 0.0
    %v1720 = vmax.f32 %v1688, 0.0
    %v1721 = vmax.f32 %v1689, 0.0
    %v1722 = vmax.f32 %v1690, 0.0
    %v1723 = vmax.f32 %v1691, 0.0
    %v1724 = vmax.f32 %v1692, 0.0
    %v1725 = vmax.f32 %v1693, 0.0
    %v1726 = vmax.f32 %v1694, 0.0
    %v1727 = vmax.f32 %v1695, 0.0
    %v1728 = vmax.f32 %v1696, 0.0
    %v1729 = vmax.f32 %v1697, 0.0
    %v1730 = vmax.f32 %v1698, 0.0
    %v1731 = vmax.f32 %v1699, 0.0
    %v1732 = vmax.f32 %v1700, 0.0
    %v1733 = vlaneseq
    %v1734 = vshrl.u32 %v1733, 7
    %v1735 = vsub.s32 0, %v1734
    %v1736 = vrot.slane %v1411, %v1735
    %1738 = vbcast.lane.b32.xlu0 %v1736, 256
    %v1739 = vpop.permute.xlu0 %1738
    %s1741 = sor.u32 256, 8
    %1742 = vbcast.lane.b32.xlu0 %v1736, %s1741
    %v1743 = vpop.permute.xlu0 %1742
    %s1745 = sor.u32 256, 16
    %1746 = vbcast.lane.b32.xlu0 %v1736, %s1745
    %v1747 = vpop.permute.xlu0 %1746
    %s1749 = sor.u32 256, 24
    %1750 = vbcast.lane.b32.xlu0 %v1736, %s1749
    %v1751 = vpop.permute.xlu0 %1750
    %v1752 = vlaneseq
    %v1753 = vshrl.u32 %v1752, 7
    %v1754 = vsub.s32 0, %v1753
    %v1755 = vrot.slane %v1413, %v1754
    %1757 = vbcast.lane.b32.xlu0 %v1755, 256
    %v1758 = vpop.permute.xlu0 %1757
    %s1760 = sor.u32 256, 8
    %1761 = vbcast.lane.b32.xlu0 %v1755, %s1760
    %v1762 = vpop.permute.xlu0 %1761
    %s1764 = sor.u32 256, 16
    %1765 = vbcast.lane.b32.xlu0 %v1755, %s1764
    %v1766 = vpop.permute.xlu0 %1765
    %s1768 = sor.u32 256, 24
    %1769 = vbcast.lane.b32.xlu0 %v1755, %s1768
    %v1770 = vpop.permute.xlu0 %1769
    %v1771 = vlaneseq
    %v1772 = vshrl.u32 %v1771, 7
    %v1773 = vsub.s32 0, %v1772
    %v1774 = vrot.slane %v1415, %v1773
    %1776 = vbcast.lane.b32.xlu0 %v1774, 256
    %v1777 = vpop.permute.xlu0 %1776
    %s1779 = sor.u32 256, 8
    %1780 = vbcast.lane.b32.xlu0 %v1774, %s1779
    %v1781 = vpop.permute.xlu0 %1780
    %s1783 = sor.u32 256, 16
    %1784 = vbcast.lane.b32.xlu0 %v1774, %s1783
    %v1785 = vpop.permute.xlu0 %1784
    %s1787 = sor.u32 256, 24
    %1788 = vbcast.lane.b32.xlu0 %v1774, %s1787
    %v1789 = vpop.permute.xlu0 %1788
    %v1790 = vlaneseq
    %v1791 = vshrl.u32 %v1790, 7
    %v1792 = vsub.s32 0, %v1791
    %v1793 = vrot.slane %v1417, %v1792
    %1795 = vbcast.lane.b32.xlu0 %v1793, 256
    %v1796 = vpop.permute.xlu0 %1795
    %s1798 = sor.u32 256, 8
    %1799 = vbcast.lane.b32.xlu0 %v1793, %s1798
    %v1800 = vpop.permute.xlu0 %1799
    %s1802 = sor.u32 256, 16
    %1803 = vbcast.lane.b32.xlu0 %v1793, %s1802
    %v1804 = vpop.permute.xlu0 %1803
    %s1806 = sor.u32 256, 24
    %1807 = vbcast.lane.b32.xlu0 %v1793, %s1806
    %v1808 = vpop.permute.xlu0 %1807
    %v1809 = vlaneseq
    %v1810 = vshrl.u32 %v1809, 7
    %v1811 = vsub.s32 0, %v1810
    %v1812 = vrot.slane %v1419, %v1811
    %1814 = vbcast.lane.b32.xlu0 %v1812, 256
    %v1815 = vpop.permute.xlu0 %1814
    %s1817 = sor.u32 256, 8
    %1818 = vbcast.lane.b32.xlu0 %v1812, %s1817
    %v1819 = vpop.permute.xlu0 %1818
    %s1821 = sor.u32 256, 16
    %1822 = vbcast.lane.b32.xlu0 %v1812, %s1821
    %v1823 = vpop.permute.xlu0 %1822
    %s1825 = sor.u32 256, 24
    %1826 = vbcast.lane.b32.xlu0 %v1812, %s1825
    %v1827 = vpop.permute.xlu0 %1826
    %v1828 = vlaneseq
    %v1829 = vshrl.u32 %v1828, 7
    %v1830 = vsub.s32 0, %v1829
    %v1831 = vrot.slane %v1421, %v1830
    %1833 = vbcast.lane.b32.xlu0 %v1831, 256
    %v1834 = vpop.permute.xlu0 %1833
    %s1836 = sor.u32 256, 8
    %1837 = vbcast.lane.b32.xlu0 %v1831, %s1836
    %v1838 = vpop.permute.xlu0 %1837
    %s1840 = sor.u32 256, 16
    %1841 = vbcast.lane.b32.xlu0 %v1831, %s1840
    %v1842 = vpop.permute.xlu0 %1841
    %s1844 = sor.u32 256, 24
    %1845 = vbcast.lane.b32.xlu0 %v1831, %s1844
    %v1846 = vpop.permute.xlu0 %1845
    %v1847 = vlaneseq
    %v1848 = vshrl.u32 %v1847, 7
    %v1849 = vsub.s32 0, %v1848
    %v1850 = vrot.slane %v1423, %v1849
    %1852 = vbcast.lane.b32.xlu0 %v1850, 256
    %v1853 = vpop.permute.xlu0 %1852
    %s1855 = sor.u32 256, 8
    %1856 = vbcast.lane.b32.xlu0 %v1850, %s1855
    %v1857 = vpop.permute.xlu0 %1856
    %s1859 = sor.u32 256, 16
    %1860 = vbcast.lane.b32.xlu0 %v1850, %s1859
    %v1861 = vpop.permute.xlu0 %1860
    %s1863 = sor.u32 256, 24
    %1864 = vbcast.lane.b32.xlu0 %v1850, %s1863
    %v1865 = vpop.permute.xlu0 %1864
    %v1866 = vlaneseq
    %v1867 = vshrl.u32 %v1866, 7
    %v1868 = vsub.s32 0, %v1867
    %v1869 = vrot.slane %v1425, %v1868
    %1871 = vbcast.lane.b32.xlu0 %v1869, 256
    %v1872 = vpop.permute.xlu0 %1871
    %s1874 = sor.u32 256, 8
    %1875 = vbcast.lane.b32.xlu0 %v1869, %s1874
    %v1876 = vpop.permute.xlu0 %1875
    %s1878 = sor.u32 256, 16
    %1879 = vbcast.lane.b32.xlu0 %v1869, %s1878
    %v1880 = vpop.permute.xlu0 %1879
    %s1882 = sor.u32 256, 24
    %1883 = vbcast.lane.b32.xlu0 %v1869, %s1882
    %v1884 = vpop.permute.xlu0 %1883
    %v1885 = vmul.f32 %v1739, %v1701
    %v1886 = vmul.f32 %v1743, %v1702
    %v1887 = vmul.f32 %v1747, %v1703
    %v1888 = vmul.f32 %v1751, %v1704
    %v1889 = vmul.f32 %v1758, %v1705
    %v1890 = vmul.f32 %v1762, %v1706
    %v1891 = vmul.f32 %v1766, %v1707
    %v1892 = vmul.f32 %v1770, %v1708
    %v1893 = vmul.f32 %v1777, %v1709
    %v1894 = vmul.f32 %v1781, %v1710
    %v1895 = vmul.f32 %v1785, %v1711
    %v1896 = vmul.f32 %v1789, %v1712
    %v1897 = vmul.f32 %v1796, %v1713
    %v1898 = vmul.f32 %v1800, %v1714
    %v1899 = vmul.f32 %v1804, %v1715
    %v1900 = vmul.f32 %v1808, %v1716
    %v1901 = vmul.f32 %v1815, %v1717
    %v1902 = vmul.f32 %v1819, %v1718
    %v1903 = vmul.f32 %v1823, %v1719
    %v1904 = vmul.f32 %v1827, %v1720
    %v1905 = vmul.f32 %v1834, %v1721
    %v1906 = vmul.f32 %v1838, %v1722
    %v1907 = vmul.f32 %v1842, %v1723
    %v1908 = vmul.f32 %v1846, %v1724
    %v1909 = vmul.f32 %v1853, %v1725
    %v1910 = vmul.f32 %v1857, %v1726
    %v1911 = vmul.f32 %v1861, %v1727
    %v1912 = vmul.f32 %v1865, %v1728
    %v1913 = vmul.f32 %v1872, %v1729
    %v1914 = vmul.f32 %v1876, %v1730
    %v1915 = vmul.f32 %v1880, %v1731
    %v1916 = vmul.f32 %v1884, %v1732
    %v1917 = vsel %vm287, %v1885, 0.0
    %v1918 = vsel %vm287, %v1886, 0.0
    %v1919 = vadd.f32 %v1917, %v1918
    %v1920 = vsel %vm287, %v1887, 0.0
    %v1921 = vadd.f32 %v1919, %v1920
    %v1922 = vsel %vm287, %v1888, 0.0
    %v1923 = vadd.f32 %v1921, %v1922
    %v1924 = vrot.slane %v1923, 4
    %v1925 = vadd.f32 %v1923, %v1924
    %v1926 = vrot.slane %v1925, 2
    %v1927 = vadd.f32 %v1925, %v1926
    %v1928 = vrot.slane %v1927, 1
    %v1929 = vadd.f32 %v1927, %v1928
    %v1930 = vsel %vm287, %v1889, 0.0
    %v1931 = vsel %vm287, %v1890, 0.0
    %v1932 = vadd.f32 %v1930, %v1931
    %v1933 = vsel %vm287, %v1891, 0.0
    %v1934 = vadd.f32 %v1932, %v1933
    %v1935 = vsel %vm287, %v1892, 0.0
    %v1936 = vadd.f32 %v1934, %v1935
    %v1937 = vrot.slane %v1936, 4
    %v1938 = vadd.f32 %v1936, %v1937
    %v1939 = vrot.slane %v1938, 2
    %v1940 = vadd.f32 %v1938, %v1939
    %v1941 = vrot.slane %v1940, 1
    %v1942 = vadd.f32 %v1940, %v1941
    %v1943 = vsel %vm287, %v1893, 0.0
    %v1944 = vsel %vm287, %v1894, 0.0
    %v1945 = vadd.f32 %v1943, %v1944
    %v1946 = vsel %vm287, %v1895, 0.0
    %v1947 = vadd.f32 %v1945, %v1946
    %v1948 = vsel %vm287, %v1896, 0.0
    %v1949 = vadd.f32 %v1947, %v1948
    %v1950 = vrot.slane %v1949, 4
    %v1951 = vadd.f32 %v1949, %v1950
    %v1952 = vrot.slane %v1951, 2
    %v1953 = vadd.f32 %v1951, %v1952
    %v1954 = vrot.slane %v1953, 1
    %v1955 = vadd.f32 %v1953, %v1954
    %v1956 = vsel %vm287, %v1897, 0.0
    %v1957 = vsel %vm287, %v1898, 0.0
    %v1958 = vadd.f32 %v1956, %v1957
    %v1959 = vsel %vm287, %v1899, 0.0
    %v1960 = vadd.f32 %v1958, %v1959
    %v1961 = vsel %vm287, %v1900, 0.0
    %v1962 = vadd.f32 %v1960, %v1961
    %v1963 = vrot.slane %v1962, 4
    %v1964 = vadd.f32 %v1962, %v1963
    %v1965 = vrot.slane %v1964, 2
    %v1966 = vadd.f32 %v1964, %v1965
    %v1967 = vrot.slane %v1966, 1
    %v1968 = vadd.f32 %v1966, %v1967
    %v1969 = vsel %vm287, %v1901, 0.0
    %v1970 = vsel %vm287, %v1902, 0.0
    %v1971 = vadd.f32 %v1969, %v1970
    %v1972 = vsel %vm287, %v1903, 0.0
    %v1973 = vadd.f32 %v1971, %v1972
    %v1974 = vsel %vm287, %v1904, 0.0
    %v1975 = vadd.f32 %v1973, %v1974
    %v1976 = vrot.slane %v1975, 4
    %v1977 = vadd.f32 %v1975, %v1976
    %v1978 = vrot.slane %v1977, 2
    %v1979 = vadd.f32 %v1977, %v1978
    %v1980 = vrot.slane %v1979, 1
    %v1981 = vadd.f32 %v1979, %v1980
    %v1982 = vsel %vm287, %v1905, 0.0
    %v1983 = vsel %vm287, %v1906, 0.0
    %v1984 = vadd.f32 %v1982, %v1983
    %v1985 = vsel %vm287, %v1907, 0.0
    %v1986 = vadd.f32 %v1984, %v1985
    %v1987 = vsel %vm287, %v1908, 0.0
    %v1988 = vadd.f32 %v1986, %v1987
    %v1989 = vrot.slane %v1988, 4
    %v1990 = vadd.f32 %v1988, %v1989
    %v1991 = vrot.slane %v1990, 2
    %v1992 = vadd.f32 %v1990, %v1991
    %v1993 = vrot.slane %v1992, 1
    %v1994 = vadd.f32 %v1992, %v1993
    %v1995 = vsel %vm287, %v1909, 0.0
    %v1996 = vsel %vm287, %v1910, 0.0
    %v1997 = vadd.f32 %v1995, %v1996
    %v1998 = vsel %vm287, %v1911, 0.0
    %v1999 = vadd.f32 %v1997, %v1998
    %v2000 = vsel %vm287, %v1912, 0.0
    %v2001 = vadd.f32 %v1999, %v2000
    %v2002 = vrot.slane %v2001, 4
    %v2003 = vadd.f32 %v2001, %v2002
    %v2004 = vrot.slane %v2003, 2
    %v2005 = vadd.f32 %v2003, %v2004
    %v2006 = vrot.slane %v2005, 1
    %v2007 = vadd.f32 %v2005, %v2006
    %v2008 = vsel %vm287, %v1913, 0.0
    %v2009 = vsel %vm287, %v1914, 0.0
    %v2010 = vadd.f32 %v2008, %v2009
    %v2011 = vsel %vm287, %v1915, 0.0
    %v2012 = vadd.f32 %v2010, %v2011
    %v2013 = vsel %vm287, %v1916, 0.0
    %v2014 = vadd.f32 %v2012, %v2013
    %v2015 = vrot.slane %v2014, 4
    %v2016 = vadd.f32 %v2014, %v2015
    %v2017 = vrot.slane %v2016, 2
    %v2018 = vadd.f32 %v2016, %v2017
    %v2019 = vrot.slane %v2018, 1
    %v2020 = vadd.f32 %v2018, %v2019
    %v2021 = vld [vmem:[#allocation3 + $0xb0] sm:$0xff]
    %v2022 = vld [vmem:[#allocation3 + $0xb8] sm:$0xff]
    %v2023 = vld [vmem:[#allocation3 + $0xc0] sm:$0xff]
    %v2024 = vld [vmem:[#allocation3 + $0xc8] sm:$0xff]
    %v2025 = vld [vmem:[#allocation3 + $0xd0] sm:$0xff]
    %v2026 = vld [vmem:[#allocation3 + $0xd8] sm:$0xff]
    %v2027 = vld [vmem:[#allocation3 + $0xe0] sm:$0xff]
    %v2028 = vld [vmem:[#allocation3 + $0xe8] sm:$0xff]
    %v2037 = vsel %vm741, %v1942, %v1929
    %v2038 = vsel %vm742, %v1955, %v2037
    %v2039 = vsel %vm744, %v1968, %v2038
    %v2040 = vsel %vm746, %v1981, %v2039
    %v2041 = vsel %vm748, %v1994, %v2040
    %v2042 = vsel %vm750, %v2007, %v2041
    %v2043 = vsel %vm752, %v2020, %v2042
    %v2044 = vsel %vm287, %v2043, 0
    %2046 = vmatprep.subr.mxu0 0.0
    %2047 = vmatpush1.msra.mxu0 %v2021
    %2048 = vmatprep.subr.mxu0 0.0
    %2049 = vmatpush1.msra.mxu0 %v2022
    %2050 = vmatprep.subr.mxu0 0.0
    %2051 = vmatpush1.msra.mxu0 %v2023
    %2052 = vmatprep.subr.mxu0 0.0
    %2053 = vmatpush1.msra.mxu0 %v2024
    %2054 = vmatprep.subr.mxu0 0.0
    %2055 = vmatpush1.msra.mxu0 %v2025
    %2056 = vmatprep.subr.mxu0 0.0
    %2057 = vmatpush1.msra.mxu0 %v2026
    %2058 = vmatprep.subr.mxu0 0.0
    %2059 = vmatpush1.msra.mxu0 %v2027
    %2060 = vmatprep.subr.mxu0 0.0
    %2061 = vmatpush1.msra.mxu0 %v2028
    %2062 = vmatprep.subr.mxu0 0.0
    %2063 = vmatpush1.msra.mxu0 0.0
    %2064 = vmatprep.subr.mxu0 0.0
    %2065 = vmatpush1.msra.mxu0 0.0
    %2066 = vmatprep.subr.mxu0 0.0
    %2067 = vmatpush1.msra.mxu0 0.0
    %2068 = vmatprep.subr.mxu0 0.0
    %2069 = vmatpush1.msra.mxu0 0.0
    %2070 = vmatprep.subr.mxu0 0.0
    %2071 = vmatpush1.msra.mxu0 0.0
    %2072 = vmatprep.subr.mxu0 0.0
    %2073 = vmatpush1.msra.mxu0 0.0
    %2074 = vmatprep.subr.mxu0 0.0
    %2075 = vmatpush1.msra.mxu0 0.0
    %2076 = vmatprep.subr.mxu0 0.0
    %2077 = vmatpush1.msra.mxu0 0.0
    %2078 = vmatprep.subr.mxu0 0.0
    %2079 = vmatpush1.msra.mxu0 0.0
    %2080 = vmatprep.subr.mxu0 0.0
    %2081 = vmatpush1.msra.mxu0 0.0
    %2082 = vmatprep.subr.mxu0 0.0
    %2083 = vmatpush1.msra.mxu0 0.0
    %2084 = vmatprep.subr.mxu0 0.0
    %2085 = vmatpush1.msra.mxu0 0.0
    %2086 = vmatprep.subr.mxu0 0.0
    %2087 = vmatpush1.msra.mxu0 0.0
    %2088 = vmatprep.subr.mxu0 0.0
    %2089 = vmatpush1.msra.mxu0 0.0
    %2090 = vmatprep.subr.mxu0 0.0
    %2091 = vmatpush1.msra.mxu0 0.0
    %2092 = vmatprep.subr.mxu0 0.0
    %2093 = vmatpush1.msra.mxu0 0.0
    %2094 = vmatprep.subr.mxu0 0.0
    %2095 = vmatpush1.msra.mxu0 0.0
    %2096 = vmatprep.subr.mxu0 0.0
    %2097 = vmatpush1.msra.mxu0 0.0
    %2098 = vmatprep.subr.mxu0 0.0
    %2099 = vmatpush1.msra.mxu0 0.0
    %2100 = vmatprep.subr.mxu0 0.0
    %2101 = vmatpush1.msra.mxu0 0.0
    %2102 = vmatprep.subr.mxu0 0.0
    %2103 = vmatpush1.msra.mxu0 0.0
    %2104 = vmatprep.subr.mxu0 0.0
    %2105 = vmatpush1.msra.mxu0 0.0
    %2106 = vmatprep.subr.mxu0 0.0
    %2107 = vmatpush1.msra.mxu0 0.0
    %2108 = vmatprep.subr.mxu0 0.0
    %2109 = vmatpush1.msra.mxu0 0.0
    %2110 = vmatprep.mubr.f32.mxu0 0.0
    %2111 = vmatmul.mubr.f32.gmra.mrb[0].mxu0 %v2044
    %v2112 = vpop.f32.mrb[0].mxu0
    %v2113 = vadd.f32 0.0, %v2112
    %v2114 = vpop.f32.mrb[0].mxu0
    %2115 = vdwg.mxu0
    %v2116 = vadd.f32 %v403, %v1478
    %v2117 = vadd.f32 %v2116, %v2113
    %v2118 = vld [vmem:[#allocation3 + $0x1b8] sm:$0x1]
    %v2119 = vld [vmem:[#allocation3 + $0x1c0] sm:$0x1]
    %v2120 = vsel %vm168, %v2117, 0.0
    %2121 = vadd.xlane.f32.xlu0 %v2120
    %v2122 = vpop.xlane.xlu0 %2121
    %v2123 = vmul.f32 %v2122, %v425
    %v2124 = vsub.f32 %v2117, %v2123
    %v2125 = vmul.f32 %v2124, %v2124
    %v2126 = vsel %vm168, %v2125, 0.0
    %2127 = vadd.xlane.f32.xlu0 %v2126
    %v2128 = vpop.xlane.xlu0 %2127
    %v2129 = vmul.f32 %v2128, %v425
    %v2130 = vadd.f32 %v2129, 1e-05
    %v2131 = vrsqrt.pop %v2130
    %v2132 = vmul.f32 %v2124, %v2131
    %v2133 = vlaneseq
    %v2134 = vshrl.u32 %v2133, 7
    %v2135 = vsub.s32 0, %v2134
    %v2136 = vrot.slane %v2118, %v2135
    %v2137 = vmul.f32 %v2132, %v2136
    %v2138 = vlaneseq
    %v2139 = vshrl.u32 %v2138, 7
    %v2140 = vsub.s32 0, %v2139
    %v2141 = vrot.slane %v2119, %v2140
    %v2142 = vadd.f32 %v2137, %v2141
    %v2143 = vld [vmem:[#allocation3 + $0xf0] sm:$0xff]
    %v2144 = vld [vmem:[#allocation3 + $0xf8] sm:$0xff]
    %v2145 = vld [vmem:[#allocation3 + $0x100] sm:$0xff]
    %v2146 = vld [vmem:[#allocation3 + $0x108] sm:$0xff]
    %v2147 = vld [vmem:[#allocation3 + $0x1c8] sm:$0x1]
    %v2148 = vlaneseq
    %v2149 = vshrl.u32 %v2148, 7
    %v2150 = vsub.s32 0, %v2149
    %v2151 = vrot.slane %v2147, %v2150
    %v2153 = vsel %vm168, %v2142, 0
    %2155 = vmatprep.subr.mxu0 0.0
    %2156 = vmatpush1.msra.mxu0 %v2143
    %2157 = vmatprep.subr.mxu0 0.0
    %2158 = vmatpush1.msra.mxu0 %v2144
    %2159 = vmatprep.subr.mxu0 0.0
    %2160 = vmatpush1.msra.mxu0 %v2145
    %2161 = vmatprep.subr.mxu0 0.0
    %2162 = vmatpush1.msra.mxu0 %v2146
    %2163 = vmatprep.subr.mxu0 0.0
    %2164 = vmatpush1.msra.mxu0 0.0
    %2165 = vmatprep.subr.mxu0 0.0
    %2166 = vmatpush1.msra.mxu0 0.0
    %2167 = vmatprep.subr.mxu0 0.0
    %2168 = vmatpush1.msra.mxu0 0.0
    %2169 = vmatprep.subr.mxu0 0.0
    %2170 = vmatpush1.msra.mxu0 0.0
    %2171 = vmatprep.subr.mxu0 0.0
    %2172 = vmatpush1.msra.mxu0 0.0
    %2173 = vmatprep.subr.mxu0 0.0
    %2174 = vmatpush1.msra.mxu0 0.0
    %2175 = vmatprep.subr.mxu0 0.0
    %2176 = vmatpush1.msra.mxu0 0.0
    %2177 = vmatprep.subr.mxu0 0.0
    %2178 = vmatpush1.msra.mxu0 0.0
    %2179 = vmatprep.subr.mxu0 0.0
    %2180 = vmatpush1.msra.mxu0 0.0
    %2181 = vmatprep.subr.mxu0 0.0
    %2182 = vmatpush1.msra.mxu0 0.0
    %2183 = vmatprep.subr.mxu0 0.0
    %2184 = vmatpush1.msra.mxu0 0.0
    %2185 = vmatprep.subr.mxu0 0.0
    %2186 = vmatpush1.msra.mxu0 0.0
    %2187 = vmatprep.subr.mxu0 0.0
    %2188 = vmatpush1.msra.mxu0 0.0
    %2189 = vmatprep.subr.mxu0 0.0
    %2190 = vmatpush1.msra.mxu0 0.0
    %2191 = vmatprep.subr.mxu0 0.0
    %2192 = vmatpush1.msra.mxu0 0.0
    %2193 = vmatprep.subr.mxu0 0.0
    %2194 = vmatpush1.msra.mxu0 0.0
    %2195 = vmatprep.subr.mxu0 0.0
    %2196 = vmatpush1.msra.mxu0 0.0
    %2197 = vmatprep.subr.mxu0 0.0
    %2198 = vmatpush1.msra.mxu0 0.0
    %2199 = vmatprep.subr.mxu0 0.0
    %2200 = vmatpush1.msra.mxu0 0.0
    %2201 = vmatprep.subr.mxu0 0.0
    %2202 = vmatpush1.msra.mxu0 0.0
    %2203 = vmatprep.subr.mxu0 0.0
    %2204 = vmatpush1.msra.mxu0 0.0
    %2205 = vmatprep.subr.mxu0 0.0
    %2206 = vmatpush1.msra.mxu0 0.0
    %2207 = vmatprep.subr.mxu0 0.0
    %2208 = vmatpush1.msra.mxu0 0.0
    %2209 = vmatprep.subr.mxu0 0.0
    %2210 = vmatpush1.msra.mxu0 0.0
    %2211 = vmatprep.subr.mxu0 0.0
    %2212 = vmatpush1.msra.mxu0 0.0
    %2213 = vmatprep.subr.mxu0 0.0
    %2214 = vmatpush1.msra.mxu0 0.0
    %2215 = vmatprep.subr.mxu0 0.0
    %2216 = vmatpush1.msra.mxu0 0.0
    %2217 = vmatprep.subr.mxu0 0.0
    %2218 = vmatpush1.msra.mxu0 0.0
    %2219 = vmatprep.mubr.f32.mxu0 0.0
    %2220 = vmatmul.mubr.f32.gmra.mrb[0].mxu0 %v2153
    %v2221 = vpop.f32.mrb[0].mxu0
    %v2222 = vadd.f32 %v2151, %v2221
    %v2223 = vpop.f32.mrb[0].mxu0
    %2224 = vdwg.mxu0
    %v2225 = vmax.f32 %v2222, 0.0
    %v2226 = vld [vmem:[#allocation3 + $0x110] sm:$0xff]
    %v2227 = vld [vmem:[#allocation3 + $0x118] sm:$0xff]
    %v2228 = vld [vmem:[#allocation3 + $0x120] sm:$0xff]
    %v2229 = vld [vmem:[#allocation3 + $0x128] sm:$0xff]
    %v2230 = vld [vmem:[#allocation3 + $0x130] sm:$0xff]
    %v2231 = vld [vmem:[#allocation3 + $0x138] sm:$0xff]
    %v2232 = vld [vmem:[#allocation3 + $0x140] sm:$0xff]
    %v2233 = vld [vmem:[#allocation3 + $0x148] sm:$0xff]
    %v2235 = vsel %vm287, %v2225, 0
    %2237 = vmatprep.subr.mxu0 0.0
    %2238 = vmatpush1.msra.mxu0 %v2226
    %2239 = vmatprep.subr.mxu0 0.0
    %2240 = vmatpush1.msra.mxu0 %v2227
    %2241 = vmatprep.subr.mxu0 0.0
    %2242 = vmatpush1.msra.mxu0 %v2228
    %2243 = vmatprep.subr.mxu0 0.0
    %2244 = vmatpush1.msra.mxu0 %v2229
    %2245 = vmatprep.subr.mxu0 0.0
    %2246 = vmatpush1.msra.mxu0 %v2230
    %2247 = vmatprep.subr.mxu0 0.0
    %2248 = vmatpush1.msra.mxu0 %v2231
    %2249 = vmatprep.subr.mxu0 0.0
    %2250 = vmatpush1.msra.mxu0 %v2232
    %2251 = vmatprep.subr.mxu0 0.0
    %2252 = vmatpush1.msra.mxu0 %v2233
    %2253 = vmatprep.subr.mxu0 0.0
    %2254 = vmatpush1.msra.mxu0 0.0
    %2255 = vmatprep.subr.mxu0 0.0
    %2256 = vmatpush1.msra.mxu0 0.0
    %2257 = vmatprep.subr.mxu0 0.0
    %2258 = vmatpush1.msra.mxu0 0.0
    %2259 = vmatprep.subr.mxu0 0.0
    %2260 = vmatpush1.msra.mxu0 0.0
    %2261 = vmatprep.subr.mxu0 0.0
    %2262 = vmatpush1.msra.mxu0 0.0
    %2263 = vmatprep.subr.mxu0 0.0
    %2264 = vmatpush1.msra.mxu0 0.0
    %2265 = vmatprep.subr.mxu0 0.0
    %2266 = vmatpush1.msra.mxu0 0.0
    %2267 = vmatprep.subr.mxu0 0.0
    %2268 = vmatpush1.msra.mxu0 0.0
    %2269 = vmatprep.subr.mxu0 0.0
    %2270 = vmatpush1.msra.mxu0 0.0
    %2271 = vmatprep.subr.mxu0 0.0
    %2272 = vmatpush1.msra.mxu0 0.0
    %2273 = vmatprep.subr.mxu0 0.0
    %2274 = vmatpush1.msra.mxu0 0.0
    %2275 = vmatprep.subr.mxu0 0.0
    %2276 = vmatpush1.msra.mxu0 0.0
    %2277 = vmatprep.subr.mxu0 0.0
    %2278 = vmatpush1.msra.mxu0 0.0
    %2279 = vmatprep.subr.mxu0 0.0
    %2280 = vmatpush1.msra.mxu0 0.0
    %2281 = vmatprep.subr.mxu0 0.0
    %2282 = vmatpush1.msra.mxu0 0.0
    %2283 = vmatprep.subr.mxu0 0.0
    %2284 = vmatpush1.msra.mxu0 0.0
    %2285 = vmatprep.subr.mxu0 0.0
    %2286 = vmatpush1.msra.mxu0 0.0
    %2287 = vmatprep.subr.mxu0 0.0
    %2288 = vmatpush1.msra.mxu0 0.0
    %2289 = vmatprep.subr.mxu0 0.0
    %2290 = vmatpush1.msra.mxu0 0.0
    %2291 = vmatprep.subr.mxu0 0.0
    %2292 = vmatpush1.msra.mxu0 0.0
    %2293 = vmatprep.subr.mxu0 0.0
    %2294 = vmatpush1.msra.mxu0 0.0
    %2295 = vmatprep.subr.mxu0 0.0
    %2296 = vmatpush1.msra.mxu0 0.0
    %2297 = vmatprep.subr.mxu0 0.0
    %2298 = vmatpush1.msra.mxu0 0.0
    %2299 = vmatprep.subr.mxu0 0.0
    %2300 = vmatpush1.msra.mxu0 0.0
    %2301 = vmatprep.mubr.f32.mxu0 0.0
    %2302 = vmatmul.mubr.f32.gmra.mrb[0].mxu0 %v2235
    %v2303 = vpop.f32.mrb[0].mxu0
    %v2304 = vadd.f32 0.0, %v2303
    %v2305 = vpop.f32.mrb[0].mxu0
    %2306 = vdwg.mxu0
    %v2307 = vadd.f32 %v2117, %v2304
    %v2308 = vld [vmem:[#allocation3 + $0x1d0] sm:$0x1]
    %v2309 = vlaneseq
    %v2310 = vshrl.u32 %v2309, 7
    %v2311 = vsub.s32 0, %v2310
    %v2312 = vrot.slane %v2308, %v2311
    %v2313 = vadd.f32 %v2307, %v2312
    %v2314 = vld [vmem:[#allocation3 + $0x1d8] sm:$0x1]
    %v2315 = vld [vmem:[#allocation3 + $0x1e0] sm:$0x1]
    %v2316 = vsel %vm168, %v2313, 0.0
    %2317 = vadd.xlane.f32.xlu0 %v2316
    %v2318 = vpop.xlane.xlu0 %2317
    %v2319 = vmul.f32 %v2318, %v425
    %v2320 = vsub.f32 %v2313, %v2319
    %v2321 = vmul.f32 %v2320, %v2320
    %v2322 = vsel %vm168, %v2321, 0.0
    %2323 = vadd.xlane.f32.xlu0 %v2322
    %v2324 = vpop.xlane.xlu0 %2323
    %v2325 = vmul.f32 %v2324, %v425
    %v2326 = vadd.f32 %v2325, 1e-05
    %v2327 = vrsqrt.pop %v2326
    %v2328 = vmul.f32 %v2320, %v2327
    %v2329 = vlaneseq
    %v2330 = vshrl.u32 %v2329, 7
    %v2331 = vsub.s32 0, %v2330
    %v2332 = vrot.slane %v2314, %v2331
    %v2333 = vmul.f32 %v2328, %v2332
    %v2334 = vlaneseq
    %v2335 = vshrl.u32 %v2334, 7
    %v2336 = vsub.s32 0, %v2335
    %v2337 = vrot.slane %v2315, %v2336
    %v2338 = vadd.f32 %v2333, %v2337
    %v2339 = vmax.f32 %v2338, 0.0
    %v2340 = vld [vmem:[#allocation3 + $0x150] sm:$0xff]
    %v2341 = vld [vmem:[#allocation3 + $0x158] sm:$0xff]
    %v2342 = vld [vmem:[#allocation3 + $0x160] sm:$0xff]
    %v2343 = vld [vmem:[#allocation3 + $0x168] sm:$0xff]
    %v2344 = vld [vmem:[#allocation3 + $0x1e8] sm:$0x1]
    %v2345 = vlaneseq
    %v2346 = vshrl.u32 %v2345, 7
    %v2347 = vsub.s32 0, %v2346
    %v2348 = vrot.slane %v2344, %v2347
    %v2350 = vsel %vm168, %v2339, 0
    %2352 = vmatprep.subr.mxu0 0.0
    %2353 = vmatpush1.msra.mxu0 %v2340
    %2354 = vmatprep.subr.mxu0 0.0
    %2355 = vmatpush1.msra.mxu0 %v2341
    %2356 = vmatprep.subr.mxu0 0.0
    %2357 = vmatpush1.msra.mxu0 %v2342
    %2358 = vmatprep.subr.mxu0 0.0
    %2359 = vmatpush1.msra.mxu0 %v2343
    %2360 = vmatprep.subr.mxu0 0.0
    %2361 = vmatpush1.msra.mxu0 0.0
    %2362 = vmatprep.subr.mxu0 0.0
    %2363 = vmatpush1.msra.mxu0 0.0
    %2364 = vmatprep.subr.mxu0 0.0
    %2365 = vmatpush1.msra.mxu0 0.0
    %2366 = vmatprep.subr.mxu0 0.0
    %2367 = vmatpush1.msra.mxu0 0.0
    %2368 = vmatprep.subr.mxu0 0.0
    %2369 = vmatpush1.msra.mxu0 0.0
    %2370 = vmatprep.subr.mxu0 0.0
    %2371 = vmatpush1.msra.mxu0 0.0
    %2372 = vmatprep.subr.mxu0 0.0
    %2373 = vmatpush1.msra.mxu0 0.0
    %2374 = vmatprep.subr.mxu0 0.0
    %2375 = vmatpush1.msra.mxu0 0.0
    %2376 = vmatprep.subr.mxu0 0.0
    %2377 = vmatpush1.msra.mxu0 0.0
    %2378 = vmatprep.subr.mxu0 0.0
    %2379 = vmatpush1.msra.mxu0 0.0
    %2380 = vmatprep.subr.mxu0 0.0
    %2381 = vmatpush1.msra.mxu0 0.0
    %2382 = vmatprep.subr.mxu0 0.0
    %2383 = vmatpush1.msra.mxu0 0.0
    %2384 = vmatprep.subr.mxu0 0.0
    %2385 = vmatpush1.msra.mxu0 0.0
    %2386 = vmatprep.subr.mxu0 0.0
    %2387 = vmatpush1.msra.mxu0 0.0
    %2388 = vmatprep.subr.mxu0 0.0
    %2389 = vmatpush1.msra.mxu0 0.0
    %2390 = vmatprep.subr.mxu0 0.0
    %2391 = vmatpush1.msra.mxu0 0.0
    %2392 = vmatprep.subr.mxu0 0.0
    %2393 = vmatpush1.msra.mxu0 0.0
    %2394 = vmatprep.subr.mxu0 0.0
    %2395 = vmatpush1.msra.mxu0 0.0
    %2396 = vmatprep.subr.mxu0 0.0
    %2397 = vmatpush1.msra.mxu0 0.0
    %2398 = vmatprep.subr.mxu0 0.0
    %2399 = vmatpush1.msra.mxu0 0.0
    %2400 = vmatprep.subr.mxu0 0.0
    %2401 = vmatpush1.msra.mxu0 0.0
    %2402 = vmatprep.subr.mxu0 0.0
    %2403 = vmatpush1.msra.mxu0 0.0
    %2404 = vmatprep.subr.mxu0 0.0
    %2405 = vmatpush1.msra.mxu0 0.0
    %2406 = vmatprep.subr.mxu0 0.0
    %2407 = vmatpush1.msra.mxu0 0.0
    %2408 = vmatprep.subr.mxu0 0.0
    %2409 = vmatpush1.msra.mxu0 0.0
    %2410 = vmatprep.subr.mxu0 0.0
    %2411 = vmatpush1.msra.mxu0 0.0
    %2412 = vmatprep.subr.mxu0 0.0
    %2413 = vmatpush1.msra.mxu0 0.0
    %2414 = vmatprep.subr.mxu0 0.0
    %2415 = vmatpush1.msra.mxu0 0.0
    %2416 = vmatprep.mubr.f32.mxu0 0.0
    %2417 = vmatmul.mubr.f32.gmra.mrb[0].mxu0 %v2350
    %v2418 = vpop.f32.mrb[0].mxu0
    %v2419 = vadd.f32 %v2348, %v2418
    %v2420 = vpop.f32.mrb[0].mxu0
    %2421 = vdwg.mxu0
    %vm2422 = vcmask 7168
    %2423 = vst.msk [vmem:[%s4] sm:$0xff] %vm2422, %v2419
    // Predicated region
    $region22: #{tabr_forward.1} parent=1 // pred_check
      _
    $region23: #{tabr_forward.1} parent=1 // pred_check_branch
      %2425 = sbr.rel (0) target = $region25
    $region24: #{tabr_forward.1} parent=1 // pred_region
      _
    $region25: #{tabr_forward.1} parent=1 // pred_fallthru
      _
    // Predicated region
    $region26: #{tabr_forward.1} parent=1 // pred_check
      _
    $region27: #{tabr_forward.1} parent=1 // pred_check_branch
      %2427 = sbr.rel (0) target = $region29
    $region28: #{tabr_forward.1} parent=1 // pred_region
      _
    $region29: #{tabr_forward.1} parent=1 // pred_fallthru
      _
    %2428 = vsyncpa [#allocation4], 1

</llo_original>
